<compile_context>
chip_gen: v6e
topology: v6e:2x2x1
jax: 0.10.0
libtpu: 0.0.40
codegen_flags: <defaults>
</compile_context>

<pallas_src>
import jax
import jax.numpy as jnp
import numpy as np
from jax.experimental import pallas as pl
from jax.experimental.pallas import tpu as pltpu

NUM_NODES = 68        # 68 facial landmarks
IN_FEAT = 2           # (x, y) per landmark
EMB = 128             # encoder_embedding_size
NUM_CLUSTERS = 8      # decoder flattens to 1024 = 8 * 128
N_PAD = 128           # node axis padded to a full lane tile


def _encoder_kernel(x_ref, a_ref,
                    w1r_ref, w1o_ref, b1_ref,
                    w2c_ref, b2_ref,
                    w3c_ref, b3_ref,
                    st_ref, out_ref):
    f32 = jnp.float32
    bf16 = jnp.bfloat16

    A = a_ref[...]                                   # (N_PAD, N_PAD) bf16; small int edge counts (exact)

    # ---- layer 1: K=2 contractions stay on the VPU (broadcast outer products);
    #      only the well-shaped 128x128x128 matmul A @ (x W_rel) goes to the MXU.
    x = x_ref[0]                                     # (N_PAD, 2) f32, zero-padded rows
    x0 = x[:, 0:1]
    x1 = x[:, 1:2]
    w1r = w1r_ref[...]                               # (2, EMB) f32
    w1o = w1o_ref[...]
    xr = x0 * w1r[0:1, :] + x1 * w1r[1:2, :]         # x @ W_rel   (VPU)
    xo = x0 * w1o[0:1, :] + x1 * w1o[1:2, :]         # x @ W_root  (VPU)
    agg = jnp.dot(A, xr.astype(bf16), preferred_element_type=f32)
    h = jnp.maximum(agg + xo + b1_ref[...], 0.0)     # (N_PAD, EMB) f32

    # ---- layers 2 & 3: fused rel+root -> one K=256 bf16 matmul per layer.
    def fused_graph_conv(h, w_cat_ref, b_ref):
        hb = h.astype(bf16)
        agg = jnp.dot(A, hb, preferred_element_type=f32)           # sum_{j->i} h_j
        h_cat = jnp.concatenate([agg.astype(bf16), hb], axis=-1)   # (N_PAD, 2*EMB)
        out = jnp.dot(h_cat, w_cat_ref[...], preferred_element_type=f32) + b_ref[...]
        return jnp.maximum(out, 0.0)

    h = fused_graph_conv(h, w2c_ref, b2_ref)
    h = fused_graph_conv(h, w3c_ref, b3_ref)

    # ---- dense_diff_pool "out" branch: softmax(s, clusters)^T @ h
    st = st_ref[0]                                   # (C, N_PAD) f32, clusters on sublanes
    st = st - jnp.max(st, axis=0, keepdims=True)
    e = jnp.exp(st)
    s_soft = e * pl.reciprocal(jnp.sum(e, axis=0, keepdims=True), approx=True)
    # zero the padded node columns (padded h rows are relu(bias) != 0, padded softmax
    # columns would be uniform 1/C -> they must not contribute)
    lane = jax.lax.broadcasted_iota(jnp.int32, s_soft.shape, 1)
    s_soft = jnp.where(lane < NUM_NODES, s_soft, 0.0)
    out_ref[0] = jnp.dot(s_soft, h, preferred_element_type=f32)    # (C, EMB)


def lmrknet_forward(x, edge_index, adj, s, params):
    """lmrkNet.forward, batched over graphs/frames.

    x:          (B, 68, 2) node features (landmark coords); B=1 reproduces the module.
    edge_index: (2, E) int32, row 0 = source j, row 1 = target i (shared across batch)
    adj:        (1, 68, 68) — accepted for signature parity; only feeds the unused
                diff-pool aux losses, so it is not read by the kernel.
    s:          (B, 68, 8) cluster-assignment logits
    returns:    (B, 8, 128) pooled feature
    """
    del adj
    B = x.shape[0]
    f32 = jnp.float32

    # Dense aggregation matrix for aggr='add': A[i, j] = #edges j -> i,
    # built as a one-hot matmul (avoids a serialized TPU scatter).
    dst_oh = jax.nn.one_hot(edge_index[1], N_PAD, dtype=f32)      # (E, N_PAD)
    src_oh = jax.nn.one_hot(edge_index[0], N_PAD, dtype=f32)      # (E, N_PAD)
    A = jnp.einsum('ei,ej->ij', dst_oh, src_oh).astype(jnp.bfloat16)  # (N_PAD, N_PAD)

    # Pad node axis to N_PAD; pre-transpose s to (C, N_PAD) for a lane-contraction dot.
    x_pad = jnp.pad(x.astype(f32), ((0, 0), (0, N_PAD - NUM_NODES), (0, 0)))
    s_t = jnp.swapaxes(s.astype(f32), 1, 2)                       # (B, C, 68)
    s_t = jnp.pad(s_t, ((0, 0), (0, 0), (0, N_PAD - NUM_NODES)))  # (B, C, N_PAD)

    # Fused [W_rel; W_root] weights for layers 2/3 (K = 256), bf16 for the MXU.
    w2c = jnp.concatenate([params["w2_rel"], params["w2_root"]], axis=0).astype(jnp.bfloat16)
    w3c = jnp.concatenate([params["w3_rel"], params["w3_root"]], axis=0).astype(jnp.bfloat16)

    feature = pl.pallas_call(
        _encoder_kernel,
        grid=(B,),
        in_specs=[
            pl.BlockSpec((1, N_PAD, IN_FEAT), lambda b: (b, 0, 0)),       # x
            pl.BlockSpec((N_PAD, N_PAD), lambda b: (0, 0)),               # A (resident)
            pl.BlockSpec((IN_FEAT, EMB), lambda b: (0, 0)),               # w1_rel
            pl.BlockSpec((IN_FEAT, EMB), lambda b: (0, 0)),               # w1_root
            pl.BlockSpec((1, EMB), lambda b: (0, 0)),                     # b1
            pl.BlockSpec((2 * EMB, EMB), lambda b: (0, 0)),               # [w2_rel; w2_root]
            pl.BlockSpec((1, EMB), lambda b: (0, 0)),                     # b2
            pl.BlockSpec((2 * EMB, EMB), lambda b: (0, 0)),               # [w3_rel; w3_root]
            pl.BlockSpec((1, EMB), lambda b: (0, 0)),                     # b3
            pl.BlockSpec((1, NUM_CLUSTERS, N_PAD), lambda b: (b, 0, 0)),  # s^T
        ],
        out_specs=pl.BlockSpec((1, NUM_CLUSTERS, EMB), lambda b: (b, 0, 0)),
        out_shape=jax.ShapeDtypeStruct((B, NUM_CLUSTERS, EMB), jnp.float32),
        compiler_params=pltpu.CompilerParams(dimension_semantics=("parallel",)),
    )(x_pad, A,
      params["w1_rel"].astype(f32), params["w1_root"].astype(f32), params["b1"].astype(f32),
      w2c, params["b2"].astype(f32),
      w3c, params["b3"].astype(f32),
      s_t)
    return feature


def _reference(x, edge_index, s, params):
    """Pure-JAX f32 reference of the same forward pass (per batch element)."""
    N = x.shape[1]
    A = jnp.zeros((N, N), jnp.float32).at[edge_index[1], edge_index[0]].add(1.0)

    def one(xb, sb):
        h = xb.astype(jnp.float32)
        for i in (1, 2, 3):
            h = jnp.maximum(
                A @ h @ params[f"w{i}_rel"] + params[f"b{i}"] + h @ params[f"w{i}_root"],
                0.0)
        ss = jax.nn.softmax(sb.astype(jnp.float32), axis=-1)
        return ss.T @ h

    return jax.vmap(one)(x, s)


def _init_params(key):
    ks = jax.random.split(key, 9)

    def lin(k, fin, fout, scale):
        return scale * jax.random.normal(k, (fin, fout), jnp.float32)

    return {
        # GraphConv weights stored as [in, out] (PyTorch Linear stores [out, in])
        "w1_rel":  lin(ks[0], IN_FEAT, EMB, 0.30),
        "w1_root": lin(ks[1], IN_FEAT, EMB, 0.30),
        "b1":      0.01 * jax.random.normal(ks[2], (1, EMB), jnp.float32),
        "w2_rel":  lin(ks[3], EMB, EMB, 0.05),
        "w2_root": lin(ks[4], EMB, EMB, 0.05),
        "b2":      0.01 * jax.random.normal(ks[5], (1, EMB), jnp.float32),
        "w3_rel":  lin(ks[6], EMB, EMB, 0.05),
        "w3_root": lin(ks[7], EMB, EMB, 0.05),
        "b3":      0.01 * jax.random.normal(ks[8], (1, EMB), jnp.float32),
    }


if __name__ == "__main__":
    key = jax.random.PRNGKey(0)
    kp, kx, ks_ = jax.random.split(key, 3)
    params = _init_params(kp)

    B = 4  # batch of frames amortizes weight DMA / launch cost (B=1 == module forward)
    x = jax.random.normal(kx, (B, NUM_NODES, IN_FEAT), jnp.float32)

    # Deterministic bidirectional ring graph over the 68 landmarks
    src = jnp.arange(NUM_NODES, dtype=jnp.int32)
    dst = (src + 1) % NUM_NODES
    edge_index = jnp.stack([jnp.concatenate([src, dst]),
                            jnp.concatenate([dst, src])])           # (2, 136)

    adj = jnp.zeros((1, NUM_NODES, NUM_NODES), jnp.float32)
    adj = adj.at[0, edge_index[1], edge_index[0]].set(1.0)

    s = jax.random.normal(ks_, (B, NUM_NODES, NUM_CLUSTERS), jnp.float32)

    fwd = jax.jit(lmrknet_forward)
    feature = jax.block_until_ready(fwd(x, edge_index, adj, s, params))

    ref = _reference(x, edge_index, s, params)
    assert feature.shape == (B, NUM_CLUSTERS, EMB), feature.shape
    # bf16 MXU inputs + approx reciprocal vs. pure-f32 reference -> relaxed tolerance
    np.testing.assert_allclose(np.asarray(feature), np.asarray(ref),
                               rtol=3e-2, atol=3e-2)
    print("KERNEL_OK")
</pallas_src>

<mosaic_0001>
module attributes {stable_mosaic.version = 11 : i64} {
  func.func @_encoder_kernel(%arg0: i32, %arg1: memref<1x128x2xf32, #tpu.memory_space<vmem>>, %arg2: memref<128x128xbf16, #tpu.memory_space<vmem>>, %arg3: memref<2x128xf32, #tpu.memory_space<vmem>>, %arg4: memref<2x128xf32, #tpu.memory_space<vmem>>, %arg5: memref<1x128xf32, #tpu.memory_space<vmem>>, %arg6: memref<256x128xbf16, #tpu.memory_space<vmem>>, %arg7: memref<1x128xf32, #tpu.memory_space<vmem>>, %arg8: memref<256x128xbf16, #tpu.memory_space<vmem>>, %arg9: memref<1x128xf32, #tpu.memory_space<vmem>>, %arg10: memref<1x8x128xf32, #tpu.memory_space<vmem>>, %arg11: memref<1x8x128xf32, #tpu.memory_space<vmem>>) attributes {dimension_semantics = [#tpu.dimension_semantics<parallel>], iteration_bounds = array<i64: 4>, scalar_prefetch = 0 : i64, scratch_operands = 0 : i64, tpu.core_type = #tpu.core_type<tc>, window_params = [{transform_indices = @transform_0, window_bounds = array<i64: 1, 128, 2>}, {pipeline_mode = #tpu.pipeline_mode<synchronous>, transform_indices = @transform_1, window_bounds = array<i64: 128, 128>}, {pipeline_mode = #tpu.pipeline_mode<synchronous>, transform_indices = @transform_2, window_bounds = array<i64: 2, 128>}, {pipeline_mode = #tpu.pipeline_mode<synchronous>, transform_indices = @transform_3, window_bounds = array<i64: 2, 128>}, {pipeline_mode = #tpu.pipeline_mode<synchronous>, transform_indices = @transform_4, window_bounds = array<i64: 1, 128>}, {pipeline_mode = #tpu.pipeline_mode<synchronous>, transform_indices = @transform_5, window_bounds = array<i64: 256, 128>}, {pipeline_mode = #tpu.pipeline_mode<synchronous>, transform_indices = @transform_6, window_bounds = array<i64: 1, 128>}, {pipeline_mode = #tpu.pipeline_mode<synchronous>, transform_indices = @transform_7, window_bounds = array<i64: 256, 128>}, {pipeline_mode = #tpu.pipeline_mode<synchronous>, transform_indices = @transform_8, window_bounds = array<i64: 1, 128>}, {transform_indices = @transform_9, window_bounds = array<i64: 1, 8, 128>}, {transform_indices = @transform_10, window_bounds = array<i64: 1, 8, 128>}]} {
    %c0 = arith.constant 0 : index
    %c0_0 = arith.constant 0 : index
    %0 = vector.load %arg2[%c0, %c0_0] : memref<128x128xbf16, #tpu.memory_space<vmem>>, vector<128x128xbf16>
    %c0_1 = arith.constant 0 : index
    %c0_2 = arith.constant 0 : index
    %c0_3 = arith.constant 0 : index
    %1 = vector.load %arg1[%c0_1, %c0_2, %c0_3] : memref<1x128x2xf32, #tpu.memory_space<vmem>>, vector<1x128x2xf32>
    %2 = vector.shape_cast %1 : vector<1x128x2xf32> to vector<128x2xf32>
    %3 = vector.extract_strided_slice %2 {offsets = [0, 0], sizes = [128, 1], strides = [1, 1]} : vector<128x2xf32> to vector<128x1xf32>
    %4 = vector.extract_strided_slice %2 {offsets = [0, 1], sizes = [128, 1], strides = [1, 1]} : vector<128x2xf32> to vector<128x1xf32>
    %c0_4 = arith.constant 0 : index
    %c0_5 = arith.constant 0 : index
    %5 = vector.load %arg3[%c0_4, %c0_5] : memref<2x128xf32, #tpu.memory_space<vmem>>, vector<2x128xf32>
    %c0_6 = arith.constant 0 : index
    %c0_7 = arith.constant 0 : index
    %6 = vector.load %arg4[%c0_6, %c0_7] : memref<2x128xf32, #tpu.memory_space<vmem>>, vector<2x128xf32>
    %7 = vector.extract_strided_slice %5 {offsets = [0, 0], sizes = [1, 128], strides = [1, 1]} : vector<2x128xf32> to vector<1x128xf32>
    %8 = vector.broadcast %3 : vector<128x1xf32> to vector<128x128xf32>
    %9 = vector.broadcast %7 : vector<1x128xf32> to vector<128x128xf32>
    %10 = arith.mulf %8, %9 : vector<128x128xf32>
    %11 = vector.extract_strided_slice %5 {offsets = [1, 0], sizes = [1, 128], strides = [1, 1]} : vector<2x128xf32> to vector<1x128xf32>
    %12 = vector.broadcast %4 : vector<128x1xf32> to vector<128x128xf32>
    %13 = vector.broadcast %11 : vector<1x128xf32> to vector<128x128xf32>
    %14 = arith.mulf %12, %13 : vector<128x128xf32>
    %15 = arith.addf %10, %14 : vector<128x128xf32>
    %16 = vector.extract_strided_slice %6 {offsets = [0, 0], sizes = [1, 128], strides = [1, 1]} : vector<2x128xf32> to vector<1x128xf32>
    %17 = vector.broadcast %3 : vector<128x1xf32> to vector<128x128xf32>
    %18 = vector.broadcast %16 : vector<1x128xf32> to vector<128x128xf32>
    %19 = arith.mulf %17, %18 : vector<128x128xf32>
    %20 = vector.extract_strided_slice %6 {offsets = [1, 0], sizes = [1, 128], strides = [1, 1]} : vector<2x128xf32> to vector<1x128xf32>
    %21 = vector.broadcast %4 : vector<128x1xf32> to vector<128x128xf32>
    %22 = vector.broadcast %20 : vector<1x128xf32> to vector<128x128xf32>
    %23 = arith.mulf %21, %22 : vector<128x128xf32>
    %24 = arith.addf %19, %23 : vector<128x128xf32>
    %25 = arith.truncf %15 : vector<128x128xf32> to vector<128x128xbf16>
    %cst = arith.constant dense<0.000000e+00> : vector<128x128xf32>
    %26 = tpu.matmul %0, %25, %cst {dimension_numbers = #tpu.dot_dimension_numbers<[1], [0], [0], [1], [0, 0, 1, 1], [], []>} : vector<128x128xbf16>, vector<128x128xbf16>, vector<128x128xf32> -> vector<128x128xf32>
    %27 = arith.addf %26, %24 : vector<128x128xf32>
    %c0_8 = arith.constant 0 : index
    %c0_9 = arith.constant 0 : index
    %28 = vector.load %arg5[%c0_8, %c0_9] : memref<1x128xf32, #tpu.memory_space<vmem>>, vector<1x128xf32>
    %29 = vector.broadcast %28 : vector<1x128xf32> to vector<128x128xf32>
    %30 = arith.addf %27, %29 : vector<128x128xf32>
    %cst_10 = arith.constant 0.000000e+00 : f32
    %31 = vector.broadcast %cst_10 : f32 to vector<128x128xf32>
    %32 = arith.maximumf %30, %31 : vector<128x128xf32>
    %33 = arith.truncf %32 : vector<128x128xf32> to vector<128x128xbf16>
    %cst_11 = arith.constant dense<0.000000e+00> : vector<128x128xf32>
    %34 = tpu.matmul %0, %33, %cst_11 {dimension_numbers = #tpu.dot_dimension_numbers<[1], [0], [0], [1], [0, 0, 1, 1], [], []>} : vector<128x128xbf16>, vector<128x128xbf16>, vector<128x128xf32> -> vector<128x128xf32>
    %35 = arith.truncf %34 : vector<128x128xf32> to vector<128x128xbf16>
    %36 = tpu.concatenate %35, %33 in 1 : vector<128x128xbf16>, vector<128x128xbf16> -> vector<128x256xbf16>
    %c0_12 = arith.constant 0 : index
    %c0_13 = arith.constant 0 : index
    %37 = vector.load %arg6[%c0_12, %c0_13] : memref<256x128xbf16, #tpu.memory_space<vmem>>, vector<256x128xbf16>
    %cst_14 = arith.constant dense<0.000000e+00> : vector<128x128xf32>
    %38 = tpu.matmul %36, %37, %cst_14 {dimension_numbers = #tpu.dot_dimension_numbers<[1], [0], [0], [1], [0, 0, 1, 1], [], []>} : vector<128x256xbf16>, vector<256x128xbf16>, vector<128x128xf32> -> vector<128x128xf32>
    %c0_15 = arith.constant 0 : index
    %c0_16 = arith.constant 0 : index
    %39 = vector.load %arg7[%c0_15, %c0_16] : memref<1x128xf32, #tpu.memory_space<vmem>>, vector<1x128xf32>
    %40 = vector.broadcast %39 : vector<1x128xf32> to vector<128x128xf32>
    %41 = arith.addf %38, %40 : vector<128x128xf32>
    %cst_17 = arith.constant 0.000000e+00 : f32
    %42 = vector.broadcast %cst_17 : f32 to vector<128x128xf32>
    %43 = arith.maximumf %41, %42 : vector<128x128xf32>
    %44 = arith.truncf %43 : vector<128x128xf32> to vector<128x128xbf16>
    %cst_18 = arith.constant dense<0.000000e+00> : vector<128x128xf32>
    %45 = tpu.matmul %0, %44, %cst_18 {dimension_numbers = #tpu.dot_dimension_numbers<[1], [0], [0], [1], [0, 0, 1, 1], [], []>} : vector<128x128xbf16>, vector<128x128xbf16>, vector<128x128xf32> -> vector<128x128xf32>
    %46 = arith.truncf %45 : vector<128x128xf32> to vector<128x128xbf16>
    %47 = tpu.concatenate %46, %44 in 1 : vector<128x128xbf16>, vector<128x128xbf16> -> vector<128x256xbf16>
    %c0_19 = arith.constant 0 : index
    %c0_20 = arith.constant 0 : index
    %48 = vector.load %arg8[%c0_19, %c0_20] : memref<256x128xbf16, #tpu.memory_space<vmem>>, vector<256x128xbf16>
    %cst_21 = arith.constant dense<0.000000e+00> : vector<128x128xf32>
    %49 = tpu.matmul %47, %48, %cst_21 {dimension_numbers = #tpu.dot_dimension_numbers<[1], [0], [0], [1], [0, 0, 1, 1], [], []>} : vector<128x256xbf16>, vector<256x128xbf16>, vector<128x128xf32> -> vector<128x128xf32>
    %c0_22 = arith.constant 0 : index
    %c0_23 = arith.constant 0 : index
    %50 = vector.load %arg9[%c0_22, %c0_23] : memref<1x128xf32, #tpu.memory_space<vmem>>, vector<1x128xf32>
    %51 = vector.broadcast %50 : vector<1x128xf32> to vector<128x128xf32>
    %52 = arith.addf %49, %51 : vector<128x128xf32>
    %cst_24 = arith.constant 0.000000e+00 : f32
    %53 = vector.broadcast %cst_24 : f32 to vector<128x128xf32>
    %54 = arith.maximumf %52, %53 : vector<128x128xf32>
    %c0_25 = arith.constant 0 : index
    %c0_26 = arith.constant 0 : index
    %c0_27 = arith.constant 0 : index
    %55 = vector.load %arg10[%c0_25, %c0_26, %c0_27] : memref<1x8x128xf32, #tpu.memory_space<vmem>>, vector<1x8x128xf32>
    %56 = vector.shape_cast %55 : vector<1x8x128xf32> to vector<8x128xf32>
    %cst_28 = arith.constant dense<0xFF800000> : vector<128xf32>
    %57 = vector.multi_reduction <maximumf>, %56, %cst_28 [0] : vector<8x128xf32> to vector<128xf32>
    %58 = vector.shape_cast %57 : vector<128xf32> to vector<1x128xf32>
    %59 = vector.broadcast %58 : vector<1x128xf32> to vector<8x128xf32>
    %60 = arith.subf %56, %59 : vector<8x128xf32>
    %61 = math.exp %60 : vector<8x128xf32>
    %cst_29 = arith.constant dense<0.000000e+00> : vector<128xf32>
    %62 = vector.multi_reduction <add>, %61, %cst_29 [0] : vector<8x128xf32> to vector<128xf32>
    %63 = vector.shape_cast %62 : vector<128xf32> to vector<1x128xf32>
    %64 = tpu.reciprocal %63 {approx = true} : vector<1x128xf32> -> vector<1x128xf32>
    %65 = vector.broadcast %64 : vector<1x128xf32> to vector<8x128xf32>
    %66 = arith.mulf %61, %65 : vector<8x128xf32>
    %67 = tpu.iota {dimensions = array<i32: 1>} : vector<8x128xi32>
    %c68_i32 = arith.constant 68 : i32
    %68 = vector.broadcast %c68_i32 : i32 to vector<8x128xi32>
    %69 = arith.cmpi slt, %67, %68 : vector<8x128xi32>
    %cst_30 = arith.constant 0.000000e+00 : f32
    %70 = vector.broadcast %cst_30 : f32 to vector<8x128xf32>
    %71 = arith.select %69, %66, %70 : vector<8x128xi1>, vector<8x128xf32>
    %cst_31 = arith.constant dense<0.000000e+00> : vector<8x128xf32>
    %72 = tpu.matmul %71, %54, %cst_31 {dimension_numbers = #tpu.dot_dimension_numbers<[1], [0], [0], [1], [0, 0, 1, 1], [], []>} : vector<8x128xf32>, vector<128x128xf32>, vector<8x128xf32> -> vector<8x128xf32>
    %c0_32 = arith.constant 0 : index
    %c0_33 = arith.constant 0 : index
    %c0_34 = arith.constant 0 : index
    %73 = vector.load %arg11[%c0_32, %c0_33, %c0_34] : memref<1x8x128xf32, #tpu.memory_space<vmem>>, vector<1x8x128xf32>
    %74 = vector.shape_cast %73 : vector<1x8x128xf32> to vector<8x128xf32>
    %75 = vector.shape_cast %72 : vector<8x128xf32> to vector<1x8x128xf32>
    tpu.vector_store %arg11[%c0_32, %c0_33, %c0_34], %75 {strides = array<i32>} : memref<1x8x128xf32, #tpu.memory_space<vmem>>, vector<1x8x128xf32>,
    return
  }
  func.func @transform_0(%arg0: i32) -> (i32, i32, i32) {
    %c0_i32 = arith.constant 0 : i32
    %c0_i32_0 = arith.constant 0 : i32
    %c0_i32_1 = arith.constant 0 : i32
    return %arg0, %c0_i32, %c0_i32_0 : i32, i32, i32
  }
  func.func @transform_1(%arg0: i32) -> (i32, i32) {
    %c0_i32 = arith.constant 0 : i32
    %c0_i32_0 = arith.constant 0 : i32
    %c0_i32_1 = arith.constant 0 : i32
    return %c0_i32, %c0_i32_0 : i32, i32
  }
  func.func @transform_2(%arg0: i32) -> (i32, i32) {
    %c0_i32 = arith.constant 0 : i32
    %c0_i32_0 = arith.constant 0 : i32
    %c0_i32_1 = arith.constant 0 : i32
    return %c0_i32, %c0_i32_0 : i32, i32
  }
  func.func @transform_3(%arg0: i32) -> (i32, i32) {
    %c0_i32 = arith.constant 0 : i32
    %c0_i32_0 = arith.constant 0 : i32
    %c0_i32_1 = arith.constant 0 : i32
    return %c0_i32, %c0_i32_0 : i32, i32
  }
  func.func @transform_4(%arg0: i32) -> (i32, i32) {
    %c0_i32 = arith.constant 0 : i32
    %c0_i32_0 = arith.constant 0 : i32
    %c0_i32_1 = arith.constant 0 : i32
    return %c0_i32, %c0_i32_0 : i32, i32
  }
  func.func @transform_5(%arg0: i32) -> (i32, i32) {
    %c0_i32 = arith.constant 0 : i32
    %c0_i32_0 = arith.constant 0 : i32
    %c0_i32_1 = arith.constant 0 : i32
    return %c0_i32, %c0_i32_0 : i32, i32
  }
  func.func @transform_6(%arg0: i32) -> (i32, i32) {
    %c0_i32 = arith.constant 0 : i32
    %c0_i32_0 = arith.constant 0 : i32
    %c0_i32_1 = arith.constant 0 : i32
    return %c0_i32, %c0_i32_0 : i32, i32
  }
  func.func @transform_7(%arg0: i32) -> (i32, i32) {
    %c0_i32 = arith.constant 0 : i32
    %c0_i32_0 = arith.constant 0 : i32
    %c0_i32_1 = arith.constant 0 : i32
    return %c0_i32, %c0_i32_0 : i32, i32
  }
  func.func @transform_8(%arg0: i32) -> (i32, i32) {
    %c0_i32 = arith.constant 0 : i32
    %c0_i32_0 = arith.constant 0 : i32
    %c0_i32_1 = arith.constant 0 : i32
    return %c0_i32, %c0_i32_0 : i32, i32
  }
  func.func @transform_9(%arg0: i32) -> (i32, i32, i32) {
    %c0_i32 = arith.constant 0 : i32
    %c0_i32_0 = arith.constant 0 : i32
    %c0_i32_1 = arith.constant 0 : i32
    return %arg0, %c0_i32, %c0_i32_0 : i32, i32, i32
  }
  func.func @transform_10(%arg0: i32) -> (i32, i32, i32) {
    %c0_i32 = arith.constant 0 : i32
    %c0_i32_0 = arith.constant 0 : i32
    %c0_i32_1 = arith.constant 0 : i32
    return %arg0, %c0_i32, %c0_i32_0 : i32, i32, i32
  }
}

</mosaic_0001>

<llo_original>
// kernel: lmrknet_forward.1
$region0: #{lmrknet_forward.1}
  #allocation0 [shape = 'u32[]', space=smem, size = 0x4, offset = 0x4, fixed_abs, tag = 'smem constant byte address 0x4 - core index']
  #allocation1 [shape = 'u32[144,128]{1,0:T(1,128)}', space=vmem, size = 0x12000, scoped, tag = 'internal scratch']
  %s0 = inlined_call_operand.vmem [shape: f32[4,128,2], index: 0, kind: input, shape index: {}]
  %s1 = inlined_call_operand.vmem [shape: bf16[128,128], index: 1, kind: input, shape index: {}]
  %s2 = inlined_call_operand.vmem [shape: f32[2,128], index: 2, kind: input, shape index: {}]
  %s3 = inlined_call_operand.vmem [shape: f32[2,128], index: 3, kind: input, shape index: {}]
  %s4 = inlined_call_operand.vmem [shape: f32[1,128], index: 4, kind: input, shape index: {}]
  %s5 = inlined_call_operand.vmem [shape: bf16[256,128], index: 5, kind: input, shape index: {}]
  %s6 = inlined_call_operand.vmem [shape: f32[1,128], index: 6, kind: input, shape index: {}]
  %s7 = inlined_call_operand.vmem [shape: bf16[256,128], index: 7, kind: input, shape index: {}]
  %s8 = inlined_call_operand.vmem [shape: f32[1,128], index: 8, kind: input, shape index: {}]
  %s9 = inlined_call_operand.vmem [shape: f32[4,8,128], index: 9, kind: input, shape index: {}]
  %s10 = inlined_call_operand.hbm [shape: f32[4,8,128], index: 10, kind: output, shape index: {}]
  %s11 = sld [smem:[#allocation0]]
  $region73: #{lmrknet_forward.1} parent=0
    _
  %s13 = ssub.s32 1, %s11
  %s14 = scalar_select 0, %s13, %s11
  $region1: #{lmrknet_forward.1} parent=0
    #allocation2 [shape = 'u8[8192]{0}', space=vmem, size = 0x2000, scoped, tag = 'output window, operand 0']
    #allocation3 [shape = 's32[2]{0}', space=sflag, size = 0x8, scoped, tag = 'scoped memory for lmrknet_forward.1']
    %15 = vsyncpa [#allocation3], 0
    %s16 = scalar_lea.sflag [#allocation3], 1
    %17 = vsyncpa %s16, 0
    loop: start=0, step=1, limit=6
    $region2: #{lmrknet_forward.1} parent=1 // loop_pre_header
      _
    $region3: #{lmrknet_forward.1} parent=1 // loop_header
      %s19 = sphi 0, %s23
      %p20 = scmp.ge.s32.totalorder %s19, 6
      %s29 = sphi 0, %s31
      %s32 = sphi 0, %s29
      %s33 = sphi 0, %s32
      %s49 = sphi 0, %s33
      %s53 = sphi 0, %s53
      %s55 = sphi 0, %s53
      %s56 = sphi 0, %s55
      %s70 = sphi 0, %s56
      %s74 = sphi 0, %s74
      %s76 = sphi 0, %s74
      %s77 = sphi 0, %s76
      %s91 = sphi 0, %s77
      %s95 = sphi 0, %s95
      %s97 = sphi 0, %s95
      %s98 = sphi 0, %s97
      %s112 = sphi 0, %s98
      %s116 = sphi 0, %s116
      %s118 = sphi 0, %s116
      %s119 = sphi 0, %s118
      %s133 = sphi 0, %s119
      %s137 = sphi 0, %s137
      %s139 = sphi 0, %s137
      %s140 = sphi 0, %s139
      %s154 = sphi 0, %s140
      %s158 = sphi 0, %s158
      %s160 = sphi 0, %s158
      %s161 = sphi 0, %s160
      %s175 = sphi 0, %s161
      %s179 = sphi 0, %s179
      %s181 = sphi 0, %s179
      %s182 = sphi 0, %s181
      %s196 = sphi 0, %s182
      %s200 = sphi 0, %s200
      %s202 = sphi 0, %s200
      %s203 = sphi 0, %s202
      %s217 = sphi 0, %s203
      %s223 = sphi 0, %s225
      %s226 = sphi 0, %s223
      %s227 = sphi 0, %s226
      %s243 = sphi 0, %s227
      %s249 = sphi 0, %s251
      %s252 = sphi 0, %s249
      %s253 = sphi 0, %s252
      %s269 = sphi 0, %s253
    $region4: #{lmrknet_forward.1} parent=1 // loop_header_branch
      %22 = sbr.rel (%p20) target = $region8
    $region5: #{lmrknet_forward.1} parent=1 // loop_body
      %s24 = ssub.s32 %s19, 1
      %s25 = ssub.s32 %s19, 2
      %s26 = sadd.s32 %s19, 1
      %s27 = ssub.s32 %s19, %s26
      %p28 = scmp.eq.s32.totalorder %s27, 0
      %s30 = sadd.s32 %s29, 1
      %s31 = scalar_select %p28, %s29, %s30
      %p34 = pneg %p28
      %p35 = scmp.eq.s32.totalorder %s19, 3
      %p36 = por %p34, %p35
      %p37 = scmp.ne.s32.totalorder %s29, %s32
      %p38 = scmp.eq.s32.totalorder %s19, 0
      %p39 = por %p37, %p38
      %p40 = scmp.ne.s32.totalorder %s29, %s32
      %p41 = scmp.eq.s32.totalorder %s24, 3
      %p42 = por %p40, %p41
      %p43 = scmp.ne.s32.totalorder %s32, %s33
      %p44 = scmp.eq.s32.totalorder %s24, 0
      %p45 = por %p43, %p44
      %p46 = scmp.ne.s32.totalorder %s32, %s33
      %p47 = scmp.eq.s32.totalorder %s25, 3
      %p48 = por %p46, %p47
      %p50 = scmp.ne.s32.totalorder %s33, %s49
      %p51 = scmp.eq.s32.totalorder %s25, 0
      %p52 = por %p50, %p51
      %s54 = sadd.s32 %s53, 1
      %p57 = scmp.eq.s32.totalorder %s19, 3
      %p58 = scmp.ne.s32.totalorder %s53, %s55
      %p59 = scmp.eq.s32.totalorder %s19, 0
      %p60 = por %p58, %p59
      %p61 = scmp.ne.s32.totalorder %s53, %s55
      %p62 = scmp.eq.s32.totalorder %s24, 3
      %p63 = por %p61, %p62
      %p64 = scmp.ne.s32.totalorder %s55, %s56
      %p65 = scmp.eq.s32.totalorder %s24, 0
      %p66 = por %p64, %p65
      %p67 = scmp.ne.s32.totalorder %s55, %s56
      %p68 = scmp.eq.s32.totalorder %s25, 3
      %p69 = por %p67, %p68
      %p71 = scmp.ne.s32.totalorder %s56, %s70
      %p72 = scmp.eq.s32.totalorder %s25, 0
      %p73 = por %p71, %p72
      %s75 = sadd.s32 %s74, 1
      %p78 = scmp.eq.s32.totalorder %s19, 3
      %p79 = scmp.ne.s32.totalorder %s74, %s76
      %p80 = scmp.eq.s32.totalorder %s19, 0
      %p81 = por %p79, %p80
      %p82 = scmp.ne.s32.totalorder %s74, %s76
      %p83 = scmp.eq.s32.totalorder %s24, 3
      %p84 = por %p82, %p83
      %p85 = scmp.ne.s32.totalorder %s76, %s77
      %p86 = scmp.eq.s32.totalorder %s24, 0
      %p87 = por %p85, %p86
      %p88 = scmp.ne.s32.totalorder %s76, %s77
      %p89 = scmp.eq.s32.totalorder %s25, 3
      %p90 = por %p88, %p89
      %p92 = scmp.ne.s32.totalorder %s77, %s91
      %p93 = scmp.eq.s32.totalorder %s25, 0
      %p94 = por %p92, %p93
      %s96 = sadd.s32 %s95, 1
      %p99 = scmp.eq.s32.totalorder %s19, 3
      %p100 = scmp.ne.s32.totalorder %s95, %s97
      %p101 = scmp.eq.s32.totalorder %s19, 0
      %p102 = por %p100, %p101
      %p103 = scmp.ne.s32.totalorder %s95, %s97
      %p104 = scmp.eq.s32.totalorder %s24, 3
      %p105 = por %p103, %p104
      %p106 = scmp.ne.s32.totalorder %s97, %s98
      %p107 = scmp.eq.s32.totalorder %s24, 0
      %p108 = por %p106, %p107
      %p109 = scmp.ne.s32.totalorder %s97, %s98
      %p110 = scmp.eq.s32.totalorder %s25, 3
      %p111 = por %p109, %p110
      %p113 = scmp.ne.s32.totalorder %s98, %s112
      %p114 = scmp.eq.s32.totalorder %s25, 0
      %p115 = por %p113, %p114
      %s117 = sadd.s32 %s116, 1
      %p120 = scmp.eq.s32.totalorder %s19, 3
      %p121 = scmp.ne.s32.totalorder %s116, %s118
      %p122 = scmp.eq.s32.totalorder %s19, 0
      %p123 = por %p121, %p122
      %p124 = scmp.ne.s32.totalorder %s116, %s118
      %p125 = scmp.eq.s32.totalorder %s24, 3
      %p126 = por %p124, %p125
      %p127 = scmp.ne.s32.totalorder %s118, %s119
      %p128 = scmp.eq.s32.totalorder %s24, 0
      %p129 = por %p127, %p128
      %p130 = scmp.ne.s32.totalorder %s118, %s119
      %p131 = scmp.eq.s32.totalorder %s25, 3
      %p132 = por %p130, %p131
      %p134 = scmp.ne.s32.totalorder %s119, %s133
      %p135 = scmp.eq.s32.totalorder %s25, 0
      %p136 = por %p134, %p135
      %s138 = sadd.s32 %s137, 1
      %p141 = scmp.eq.s32.totalorder %s19, 3
      %p142 = scmp.ne.s32.totalorder %s137, %s139
      %p143 = scmp.eq.s32.totalorder %s19, 0
      %p144 = por %p142, %p143
      %p145 = scmp.ne.s32.totalorder %s137, %s139
      %p146 = scmp.eq.s32.totalorder %s24, 3
      %p147 = por %p145, %p146
      %p148 = scmp.ne.s32.totalorder %s139, %s140
      %p149 = scmp.eq.s32.totalorder %s24, 0
      %p150 = por %p148, %p149
      %p151 = scmp.ne.s32.totalorder %s139, %s140
      %p152 = scmp.eq.s32.totalorder %s25, 3
      %p153 = por %p151, %p152
      %p155 = scmp.ne.s32.totalorder %s140, %s154
      %p156 = scmp.eq.s32.totalorder %s25, 0
      %p157 = por %p155, %p156
      %s159 = sadd.s32 %s158, 1
      %p162 = scmp.eq.s32.totalorder %s19, 3
      %p163 = scmp.ne.s32.totalorder %s158, %s160
      %p164 = scmp.eq.s32.totalorder %s19, 0
      %p165 = por %p163, %p164
      %p166 = scmp.ne.s32.totalorder %s158, %s160
      %p167 = scmp.eq.s32.totalorder %s24, 3
      %p168 = por %p166, %p167
      %p169 = scmp.ne.s32.totalorder %s160, %s161
      %p170 = scmp.eq.s32.totalorder %s24, 0
      %p171 = por %p169, %p170
      %p172 = scmp.ne.s32.totalorder %s160, %s161
      %p173 = scmp.eq.s32.totalorder %s25, 3
      %p174 = por %p172, %p173
      %p176 = scmp.ne.s32.totalorder %s161, %s175
      %p177 = scmp.eq.s32.totalorder %s25, 0
      %p178 = por %p176, %p177
      %s180 = sadd.s32 %s179, 1
      %p183 = scmp.eq.s32.totalorder %s19, 3
      %p184 = scmp.ne.s32.totalorder %s179, %s181
      %p185 = scmp.eq.s32.totalorder %s19, 0
      %p186 = por %p184, %p185
      %p187 = scmp.ne.s32.totalorder %s179, %s181
      %p188 = scmp.eq.s32.totalorder %s24, 3
      %p189 = por %p187, %p188
      %p190 = scmp.ne.s32.totalorder %s181, %s182
      %p191 = scmp.eq.s32.totalorder %s24, 0
      %p192 = por %p190, %p191
      %p193 = scmp.ne.s32.totalorder %s181, %s182
      %p194 = scmp.eq.s32.totalorder %s25, 3
      %p195 = por %p193, %p194
      %p197 = scmp.ne.s32.totalorder %s182, %s196
      %p198 = scmp.eq.s32.totalorder %s25, 0
      %p199 = por %p197, %p198
      %s201 = sadd.s32 %s200, 1
      %p204 = scmp.eq.s32.totalorder %s19, 3
      %p205 = scmp.ne.s32.totalorder %s200, %s202
      %p206 = scmp.eq.s32.totalorder %s19, 0
      %p207 = por %p205, %p206
      %p208 = scmp.ne.s32.totalorder %s200, %s202
      %p209 = scmp.eq.s32.totalorder %s24, 3
      %p210 = por %p208, %p209
      %p211 = scmp.ne.s32.totalorder %s202, %s203
      %p212 = scmp.eq.s32.totalorder %s24, 0
      %p213 = por %p211, %p212
      %p214 = scmp.ne.s32.totalorder %s202, %s203
      %p215 = scmp.eq.s32.totalorder %s25, 3
      %p216 = por %p214, %p215
      %p218 = scmp.ne.s32.totalorder %s203, %s217
      %p219 = scmp.eq.s32.totalorder %s25, 0
      %p220 = por %p218, %p219
      %s221 = ssub.s32 %s19, %s26
      %p222 = scmp.eq.s32.totalorder %s221, 0
      %s224 = sadd.s32 %s223, 1
      %s225 = scalar_select %p222, %s223, %s224
      %p228 = pneg %p222
      %p229 = scmp.eq.s32.totalorder %s19, 3
      %p230 = por %p228, %p229
      %p231 = scmp.ne.s32.totalorder %s223, %s226
      %p232 = scmp.eq.s32.totalorder %s19, 0
      %p233 = por %p231, %p232
      %p234 = scmp.ne.s32.totalorder %s223, %s226
      %p235 = scmp.eq.s32.totalorder %s24, 3
      %p236 = por %p234, %p235
      %p237 = scmp.ne.s32.totalorder %s226, %s227
      %p238 = scmp.eq.s32.totalorder %s24, 0
      %p239 = por %p237, %p238
      %p240 = scmp.ne.s32.totalorder %s226, %s227
      %p241 = scmp.eq.s32.totalorder %s25, 3
      %p242 = por %p240, %p241
      %p244 = scmp.ne.s32.totalorder %s227, %s243
      %p245 = scmp.eq.s32.totalorder %s25, 0
      %p246 = por %p244, %p245
      %s247 = ssub.s32 %s19, %s26
      %p248 = scmp.eq.s32.totalorder %s247, 0
      %s250 = sadd.s32 %s249, 1
      %s251 = scalar_select %p248, %s249, %s250
      %p254 = pneg %p248
      %p255 = scmp.eq.s32.totalorder %s19, 3
      %p256 = por %p254, %p255
      %p257 = scmp.ne.s32.totalorder %s249, %s252
      %p258 = scmp.eq.s32.totalorder %s19, 0
      %p259 = por %p257, %p258
      %p260 = scmp.ne.s32.totalorder %s249, %s252
      %p261 = scmp.eq.s32.totalorder %s24, 3
      %p262 = por %p260, %p261
      %p263 = scmp.ne.s32.totalorder %s252, %s253
      %p264 = scmp.eq.s32.totalorder %s24, 0
      %p265 = por %p263, %p264
      %p266 = scmp.ne.s32.totalorder %s252, %s253
      %p267 = scmp.eq.s32.totalorder %s25, 3
      %p268 = por %p266, %p267
      %p270 = scmp.ne.s32.totalorder %s253, %s269
      %p271 = scmp.eq.s32.totalorder %s25, 0
      %p272 = por %p270, %p271
      %p273 = scmp.le.s32.totalorder 1, %s19
      %p274 = scmp.lt.s32.totalorder %s19, 5
      %p275 = pnand %p273, %p274
      %p276 = pneg %p275
      // Predicated region
      $region9: #{lmrknet_forward.1} parent=5 // pred_check
        _
      $region10: #{lmrknet_forward.1} parent=5 // pred_check_branch
        %278 = sbr.rel (%p275) target = $region12
      $region11: #{lmrknet_forward.1} parent=5 // pred_region
        %s279 = ssub.s32 %s19, 1
        // Predicated region
        $region13: #{lmrknet_forward.1} parent=11 // pred_check
          %p280 = pneg %p66
        $region14: #{lmrknet_forward.1} parent=11 // pred_check_branch
          %282 = sbr.rel (%p280) target = $region16
        $region15: #{lmrknet_forward.1} parent=11 // pred_region
          _
        $region16: #{lmrknet_forward.1} parent=11 // pred_fallthru
          _
        // Predicated region
        $region17: #{lmrknet_forward.1} parent=11 // pred_check
          %p283 = pneg %p87
        $region18: #{lmrknet_forward.1} parent=11 // pred_check_branch
          %285 = sbr.rel (%p283) target = $region20
        $region19: #{lmrknet_forward.1} parent=11 // pred_region
          _
        $region20: #{lmrknet_forward.1} parent=11 // pred_fallthru
          _
        // Predicated region
        $region21: #{lmrknet_forward.1} parent=11 // pred_check
          %p286 = pneg %p108
        $region22: #{lmrknet_forward.1} parent=11 // pred_check_branch
          %288 = sbr.rel (%p286) target = $region24
        $region23: #{lmrknet_forward.1} parent=11 // pred_region
          _
        $region24: #{lmrknet_forward.1} parent=11 // pred_fallthru
          _
        // Predicated region
        $region25: #{lmrknet_forward.1} parent=11 // pred_check
          %p289 = pneg %p129
        $region26: #{lmrknet_forward.1} parent=11 // pred_check_branch
          %291 = sbr.rel (%p289) target = $region28
        $region27: #{lmrknet_forward.1} parent=11 // pred_region
          _
        $region28: #{lmrknet_forward.1} parent=11 // pred_fallthru
          _
        // Predicated region
        $region29: #{lmrknet_forward.1} parent=11 // pred_check
          %p292 = pneg %p150
        $region30: #{lmrknet_forward.1} parent=11 // pred_check_branch
          %294 = sbr.rel (%p292) target = $region32
        $region31: #{lmrknet_forward.1} parent=11 // pred_region
          _
        $region32: #{lmrknet_forward.1} parent=11 // pred_fallthru
          _
        // Predicated region
        $region33: #{lmrknet_forward.1} parent=11 // pred_check
          %p295 = pneg %p171
        $region34: #{lmrknet_forward.1} parent=11 // pred_check_branch
          %297 = sbr.rel (%p295) target = $region36
        $region35: #{lmrknet_forward.1} parent=11 // pred_region
          _
        $region36: #{lmrknet_forward.1} parent=11 // pred_fallthru
          _
        // Predicated region
        $region37: #{lmrknet_forward.1} parent=11 // pred_check
          %p298 = pneg %p192
        $region38: #{lmrknet_forward.1} parent=11 // pred_check_branch
          %300 = sbr.rel (%p298) target = $region40
        $region39: #{lmrknet_forward.1} parent=11 // pred_region
          _
        $region40: #{lmrknet_forward.1} parent=11 // pred_fallthru
          _
        // Predicated region
        $region41: #{lmrknet_forward.1} parent=11 // pred_check
          %p301 = pneg %p213
        $region42: #{lmrknet_forward.1} parent=11 // pred_check_branch
          %303 = sbr.rel (%p301) target = $region44
        $region43: #{lmrknet_forward.1} parent=11 // pred_region
          _
        $region44: #{lmrknet_forward.1} parent=11 // pred_fallthru
          _
      $region12: #{lmrknet_forward.1} parent=5 // pred_fallthru
        _
      %p304 = scmp.lt.s32.totalorder %s19, 4
      // Predicated region
      $region45: #{lmrknet_forward.1} parent=5 // pred_check
        %p305 = pneg %p304
      $region46: #{lmrknet_forward.1} parent=5 // pred_check_branch
        %307 = sbr.rel (%p305) target = $region48
      $region47: #{lmrknet_forward.1} parent=5 // pred_region
        // Predicated region
        $region49: #{lmrknet_forward.1} parent=47 // pred_check
          %p308 = pneg %p39
        $region50: #{lmrknet_forward.1} parent=47 // pred_check_branch
          %310 = sbr.rel (%p308) target = $region52
        $region51: #{lmrknet_forward.1} parent=47 // pred_region
          %p311 = scmp.lt.s32.totalorder %s19, 3
          %s312 = scalar_select %p311, %s19, 3
          %s313 = smul.addr %s312, 16
          %s314 = smul.addr %s313, 8
          %s315 = scalar_lea.vmem %s0, %s314
        $region52: #{lmrknet_forward.1} parent=47 // pred_fallthru
          _
        // Predicated region
        $region53: #{lmrknet_forward.1} parent=47 // pred_check
          %p316 = pneg %p233
        $region54: #{lmrknet_forward.1} parent=47 // pred_check_branch
          %318 = sbr.rel (%p316) target = $region56
        $region55: #{lmrknet_forward.1} parent=47 // pred_region
          %p319 = scmp.lt.s32.totalorder %s19, 3
          %s320 = scalar_select %p319, %s19, 3
          %s321 = smul.addr %s320, 8
          %s322 = scalar_lea.vmem %s9, %s321
        $region56: #{lmrknet_forward.1} parent=47 // pred_fallthru
          _
      $region48: #{lmrknet_forward.1} parent=5 // pred_fallthru
        _
      %p323 = scmp.le.s32.totalorder 1, %s19
      %p324 = scmp.lt.s32.totalorder %s19, 5
      %p325 = pnand %p323, %p324
      %p326 = pneg %p325
      // Predicated region
      $region57: #{lmrknet_forward.1} parent=5 // pred_check
        _
      $region58: #{lmrknet_forward.1} parent=5 // pred_check_branch
        %328 = sbr.rel (%p325) target = $region60
      $region59: #{lmrknet_forward.1} parent=5 // pred_region
        %s329 = ssub.s32 %s19, 1
        %p330 = scmp.lt.s32.totalorder %s24, 3
        %s331 = scalar_select %p330, %s24, 3
        %s332 = smul.addr %s331, 16
        %s333 = smul.addr %s332, 8
        %s334 = scalar_lea.vmem %s0, %s333
        %p335 = pneg %p45
        %p336 = pneg %p42
        %p337 = pneg %p66
        %p338 = pneg %p63
        %p339 = pneg %p87
        %p340 = pneg %p84
        %p341 = pneg %p108
        %p342 = pneg %p105
        %p343 = pneg %p129
        %p344 = pneg %p126
        %p345 = pneg %p150
        %p346 = pneg %p147
        %p347 = pneg %p171
        %p348 = pneg %p168
        %p349 = pneg %p192
        %p350 = pneg %p189
        %p351 = pneg %p213
        %p352 = pneg %p210
        %p353 = scmp.lt.s32.totalorder %s24, 3
        %s354 = scalar_select %p353, %s24, 3
        %s355 = smul.addr %s354, 8
        %s356 = scalar_lea.vmem %s9, %s355
        %p357 = pneg %p239
        %p358 = pneg %p236
        %p359 = pneg %p265
        %p360 = pneg %p262
        %s361 = sand.u32 %s252, 1
        %s362 = scalar_lea.sflag [#allocation3], %s361
        %s363 = sand.u32 %s252, 1
        %s364 = smul.addr %s363, 8
        %s365 = scalar_lea.vmem [#allocation2], %s364
        %p366 = scmp.lt.s32.totalorder %s24, 3
        %s367 = scalar_select %p366, %s24, 3
        %s368 = smul.addr %s367, 16
        %s369 = smul.addr %s368, 8
        %s370 = scalar_lea.vmem %s0, %s369
        %p371 = scmp.lt.s32.totalorder %s24, 3
        %s372 = scalar_select %p371, %s24, 3
        %s373 = smul.addr %s372, 8
        %s374 = scalar_lea.vmem %s9, %s373
        %v376 = vld [vmem:[%s1] sm:$0xf]
        %v377 = vld [vmem:[%s1 + $0x4] sm:$0xf]
        %v378 = vld [vmem:[%s1 + $0x8] sm:$0xf]
        %v379 = vld [vmem:[%s1 + $0xc] sm:$0xf]
        %v380 = vld [vmem:[%s1 + $0x10] sm:$0xf]
        %v381 = vld [vmem:[%s1 + $0x14] sm:$0xf]
        %v382 = vld [vmem:[%s1 + $0x18] sm:$0xf]
        %v383 = vld [vmem:[%s1 + $0x1c] sm:$0xf]
        %v384 = vld [vmem:[%s1 + $0x20] sm:$0xf]
        %v385 = vld [vmem:[%s1 + $0x24] sm:$0xf]
        %v386 = vld [vmem:[%s1 + $0x28] sm:$0xf]
        %v387 = vld [vmem:[%s1 + $0x2c] sm:$0xf]
        %v388 = vld [vmem:[%s1 + $0x30] sm:$0xf]
        %v389 = vld [vmem:[%s1 + $0x34] sm:$0xf]
        %v390 = vld [vmem:[%s1 + $0x38] sm:$0xf]
        %v391 = vld [vmem:[%s1 + $0x3c] sm:$0xf]
        %v392 = vld [vmem:[%s370] sm:$0xff]
        %v393 = vld [vmem:[%s370 + $0x8] sm:$0xff]
        %v394 = vld [vmem:[%s370 + $0x10] sm:$0xff]
        %v395 = vld [vmem:[%s370 + $0x18] sm:$0xff]
        %v396 = vld [vmem:[%s370 + $0x20] sm:$0xff]
        %v397 = vld [vmem:[%s370 + $0x28] sm:$0xff]
        %v398 = vld [vmem:[%s370 + $0x30] sm:$0xff]
        %v399 = vld [vmem:[%s370 + $0x38] sm:$0xff]
        %v400 = vld [vmem:[%s370 + $0x40] sm:$0xff]
        %v401 = vld [vmem:[%s370 + $0x48] sm:$0xff]
        %v402 = vld [vmem:[%s370 + $0x50] sm:$0xff]
        %v403 = vld [vmem:[%s370 + $0x58] sm:$0xff]
        %v404 = vld [vmem:[%s370 + $0x60] sm:$0xff]
        %v405 = vld [vmem:[%s370 + $0x68] sm:$0xff]
        %v406 = vld [vmem:[%s370 + $0x70] sm:$0xff]
        %v407 = vld [vmem:[%s370 + $0x78] sm:$0xff]
        %v408 = vld [vmem:[%s2] sm:$0x3]
        %v409 = vld [vmem:[%s3] sm:$0x3]
        %411 = vset.pattern.permute.xlu0 0
        %412 = vperm.xlu0 %411, %v392
        %v413 = vpop.permute.xlu0 %412
        %416 = vset.pattern.permute.xlu0 0
        %417 = vperm.xlu0 %416, %v393
        %v418 = vpop.permute.xlu0 %417
        %421 = vset.pattern.permute.xlu0 0
        %422 = vperm.xlu0 %421, %v394
        %v423 = vpop.permute.xlu0 %422
        %426 = vset.pattern.permute.xlu0 0
        %427 = vperm.xlu0 %426, %v395
        %v428 = vpop.permute.xlu0 %427
        %431 = vset.pattern.permute.xlu0 0
        %432 = vperm.xlu0 %431, %v396
        %v433 = vpop.permute.xlu0 %432
        %436 = vset.pattern.permute.xlu0 0
        %437 = vperm.xlu0 %436, %v397
        %v438 = vpop.permute.xlu0 %437
        %441 = vset.pattern.permute.xlu0 0
        %442 = vperm.xlu0 %441, %v398
        %v443 = vpop.permute.xlu0 %442
        %446 = vset.pattern.permute.xlu0 0
        %447 = vperm.xlu0 %446, %v399
        %v448 = vpop.permute.xlu0 %447
        %451 = vset.pattern.permute.xlu0 0
        %452 = vperm.xlu0 %451, %v400
        %v453 = vpop.permute.xlu0 %452
        %456 = vset.pattern.permute.xlu0 0
        %457 = vperm.xlu0 %456, %v401
        %v458 = vpop.permute.xlu0 %457
        %461 = vset.pattern.permute.xlu0 0
        %462 = vperm.xlu0 %461, %v402
        %v463 = vpop.permute.xlu0 %462
        %466 = vset.pattern.permute.xlu0 0
        %467 = vperm.xlu0 %466, %v403
        %v468 = vpop.permute.xlu0 %467
        %471 = vset.pattern.permute.xlu0 0
        %472 = vperm.xlu0 %471, %v404
        %v473 = vpop.permute.xlu0 %472
        %476 = vset.pattern.permute.xlu0 0
        %477 = vperm.xlu0 %476, %v405
        %v478 = vpop.permute.xlu0 %477
        %481 = vset.pattern.permute.xlu0 0
        %482 = vperm.xlu0 %481, %v406
        %v483 = vpop.permute.xlu0 %482
        %486 = vset.pattern.permute.xlu0 0
        %487 = vperm.xlu0 %486, %v407
        %v488 = vpop.permute.xlu0 %487
        %v490 = vlaneseq
        %v491 = vshrl.u32 %v490, 7
        %v492 = vsub.s32 0, %v491
        %v493 = vrot.slane %v408, %v492
        %v494 = vmul.f32 %v413, %v493
        %v495 = vmul.f32 %v418, %v493
        %v496 = vmul.f32 %v423, %v493
        %v497 = vmul.f32 %v428, %v493
        %v498 = vmul.f32 %v433, %v493
        %v499 = vmul.f32 %v438, %v493
        %v500 = vmul.f32 %v443, %v493
        %v501 = vmul.f32 %v448, %v493
        %v502 = vmul.f32 %v453, %v493
        %v503 = vmul.f32 %v458, %v493
        %v504 = vmul.f32 %v463, %v493
        %v505 = vmul.f32 %v468, %v493
        %v506 = vmul.f32 %v473, %v493
        %v507 = vmul.f32 %v478, %v493
        %v508 = vmul.f32 %v483, %v493
        %v509 = vmul.f32 %v488, %v493
        %510 = vset.pattern.permute.xlu0 1
        %511 = vperm.xlu0 %510, %v392
        %v512 = vpop.permute.xlu0 %511
        %514 = vset.pattern.permute.xlu0 1
        %515 = vperm.xlu0 %514, %v393
        %v516 = vpop.permute.xlu0 %515
        %518 = vset.pattern.permute.xlu0 1
        %519 = vperm.xlu0 %518, %v394
        %v520 = vpop.permute.xlu0 %519
        %522 = vset.pattern.permute.xlu0 1
        %523 = vperm.xlu0 %522, %v395
        %v524 = vpop.permute.xlu0 %523
        %526 = vset.pattern.permute.xlu0 1
        %527 = vperm.xlu0 %526, %v396
        %v528 = vpop.permute.xlu0 %527
        %530 = vset.pattern.permute.xlu0 1
        %531 = vperm.xlu0 %530, %v397
        %v532 = vpop.permute.xlu0 %531
        %534 = vset.pattern.permute.xlu0 1
        %535 = vperm.xlu0 %534, %v398
        %v536 = vpop.permute.xlu0 %535
        %538 = vset.pattern.permute.xlu0 1
        %539 = vperm.xlu0 %538, %v399
        %v540 = vpop.permute.xlu0 %539
        %542 = vset.pattern.permute.xlu0 1
        %543 = vperm.xlu0 %542, %v400
        %v544 = vpop.permute.xlu0 %543
        %546 = vset.pattern.permute.xlu0 1
        %547 = vperm.xlu0 %546, %v401
        %v548 = vpop.permute.xlu0 %547
        %550 = vset.pattern.permute.xlu0 1
        %551 = vperm.xlu0 %550, %v402
        %v552 = vpop.permute.xlu0 %551
        %554 = vset.pattern.permute.xlu0 1
        %555 = vperm.xlu0 %554, %v403
        %v556 = vpop.permute.xlu0 %555
        %558 = vset.pattern.permute.xlu0 1
        %559 = vperm.xlu0 %558, %v404
        %v560 = vpop.permute.xlu0 %559
        %562 = vset.pattern.permute.xlu0 1
        %563 = vperm.xlu0 %562, %v405
        %v564 = vpop.permute.xlu0 %563
        %566 = vset.pattern.permute.xlu0 1
        %567 = vperm.xlu0 %566, %v406
        %v568 = vpop.permute.xlu0 %567
        %570 = vset.pattern.permute.xlu0 1
        %571 = vperm.xlu0 %570, %v407
        %v572 = vpop.permute.xlu0 %571
        %v574 = vlaneseq
        %v575 = vshrl.u32 %v574, 7
        %v576 = vsub.s32 1, %v575
        %v577 = vrot.slane %v408, %v576
        %v578 = vmul.f32 %v512, %v577
        %v579 = vmul.f32 %v516, %v577
        %v580 = vmul.f32 %v520, %v577
        %v581 = vmul.f32 %v524, %v577
        %v582 = vmul.f32 %v528, %v577
        %v583 = vmul.f32 %v532, %v577
        %v584 = vmul.f32 %v536, %v577
        %v585 = vmul.f32 %v540, %v577
        %v586 = vmul.f32 %v544, %v577
        %v587 = vmul.f32 %v548, %v577
        %v588 = vmul.f32 %v552, %v577
        %v589 = vmul.f32 %v556, %v577
        %v590 = vmul.f32 %v560, %v577
        %v591 = vmul.f32 %v564, %v577
        %v592 = vmul.f32 %v568, %v577
        %v593 = vmul.f32 %v572, %v577
        %v594 = vadd.f32 %v494, %v578
        %v595 = vadd.f32 %v495, %v579
        %v596 = vadd.f32 %v496, %v580
        %v597 = vadd.f32 %v497, %v581
        %v598 = vadd.f32 %v498, %v582
        %v599 = vadd.f32 %v499, %v583
        %v600 = vadd.f32 %v500, %v584
        %v601 = vadd.f32 %v501, %v585
        %v602 = vadd.f32 %v502, %v586
        %v603 = vadd.f32 %v503, %v587
        %v604 = vadd.f32 %v504, %v588
        %v605 = vadd.f32 %v505, %v589
        %v606 = vadd.f32 %v506, %v590
        %v607 = vadd.f32 %v507, %v591
        %v608 = vadd.f32 %v508, %v592
        %v609 = vadd.f32 %v509, %v593
        %v610 = vlaneseq
        %v611 = vshrl.u32 %v610, 7
        %v612 = vsub.s32 0, %v611
        %v613 = vrot.slane %v409, %v612
        %v614 = vmul.f32 %v413, %v613
        %v615 = vmul.f32 %v418, %v613
        %v616 = vmul.f32 %v423, %v613
        %v617 = vmul.f32 %v428, %v613
        %v618 = vmul.f32 %v433, %v613
        %v619 = vmul.f32 %v438, %v613
        %v620 = vmul.f32 %v443, %v613
        %v621 = vmul.f32 %v448, %v613
        %v622 = vmul.f32 %v453, %v613
        %v623 = vmul.f32 %v458, %v613
        %v624 = vmul.f32 %v463, %v613
        %v625 = vmul.f32 %v468, %v613
        %v626 = vmul.f32 %v473, %v613
        %v627 = vmul.f32 %v478, %v613
        %v628 = vmul.f32 %v483, %v613
        %v629 = vmul.f32 %v488, %v613
        %v630 = vlaneseq
        %v631 = vshrl.u32 %v630, 7
        %v632 = vsub.s32 1, %v631
        %v633 = vrot.slane %v409, %v632
        %v634 = vmul.f32 %v512, %v633
        %v635 = vmul.f32 %v516, %v633
        %v636 = vmul.f32 %v520, %v633
        %v637 = vmul.f32 %v524, %v633
        %v638 = vmul.f32 %v528, %v633
        %v639 = vmul.f32 %v532, %v633
        %v640 = vmul.f32 %v536, %v633
        %v641 = vmul.f32 %v540, %v633
        %v642 = vmul.f32 %v544, %v633
        %v643 = vmul.f32 %v548, %v633
        %v644 = vmul.f32 %v552, %v633
        %v645 = vmul.f32 %v556, %v633
        %v646 = vmul.f32 %v560, %v633
        %v647 = vmul.f32 %v564, %v633
        %v648 = vmul.f32 %v568, %v633
        %v649 = vmul.f32 %v572, %v633
        %v650 = vadd.f32 %v614, %v634
        %v651 = vadd.f32 %v615, %v635
        %v652 = vadd.f32 %v616, %v636
        %v653 = vadd.f32 %v617, %v637
        %v654 = vadd.f32 %v618, %v638
        %v655 = vadd.f32 %v619, %v639
        %v656 = vadd.f32 %v620, %v640
        %v657 = vadd.f32 %v621, %v641
        %v658 = vadd.f32 %v622, %v642
        %v659 = vadd.f32 %v623, %v643
        %v660 = vadd.f32 %v624, %v644
        %v661 = vadd.f32 %v625, %v645
        %v662 = vadd.f32 %v626, %v646
        %v663 = vadd.f32 %v627, %v647
        %v664 = vadd.f32 %v628, %v648
        %v665 = vadd.f32 %v629, %v649
        %v666 = vpack.c.bf16 %v595, %v594
        %v667 = vpack.c.bf16 %v597, %v596
        %v668 = vpack.c.bf16 %v599, %v598
        %v669 = vpack.c.bf16 %v601, %v600
        %v670 = vpack.c.bf16 %v603, %v602
        %v671 = vpack.c.bf16 %v605, %v604
        %v672 = vpack.c.bf16 %v607, %v606
        %v673 = vpack.c.bf16 %v609, %v608
        %v690 = vunpack.c.l.b16 %v376
        %v691 = vunpack.c.l.b16 %v377
        %v692 = vunpack.c.l.b16 %v378
        %v693 = vunpack.c.l.b16 %v379
        %v694 = vunpack.c.l.b16 %v380
        %v695 = vunpack.c.l.b16 %v381
        %v696 = vunpack.c.l.b16 %v382
        %v697 = vunpack.c.l.b16 %v383
        %v698 = vunpack.c.l.b16 %v384
        %v699 = vunpack.c.l.b16 %v385
        %v700 = vunpack.c.l.b16 %v386
        %v701 = vunpack.c.l.b16 %v387
        %v702 = vunpack.c.l.b16 %v388
        %v703 = vunpack.c.l.b16 %v389
        %v704 = vunpack.c.l.b16 %v390
        %v705 = vunpack.c.l.b16 %v391
        %v706 = vpack.c.b16 %v691, %v690
        %v707 = vpack.c.b16 %v693, %v692
        %v708 = vpack.c.b16 %v695, %v694
        %v709 = vpack.c.b16 %v697, %v696
        %v710 = vpack.c.b16 %v699, %v698
        %v711 = vpack.c.b16 %v701, %v700
        %v712 = vpack.c.b16 %v703, %v702
        %v713 = vpack.c.b16 %v705, %v704
        %722 = vmatprep.subr.bf16.mxu0 0
        %723 = vmatpush1.bf16.msra.mxu0 %v673
        %724 = vmatprep.subr.bf16.mxu0 0
        %725 = vmatpush1.bf16.msra.mxu0 %v672
        %726 = vmatprep.subr.bf16.mxu0 0
        %727 = vmatpush1.bf16.msra.mxu0 %v671
        %728 = vmatprep.subr.bf16.mxu0 0
        %729 = vmatpush1.bf16.msra.mxu0 %v670
        %730 = vmatprep.subr.bf16.mxu0 0
        %731 = vmatpush1.bf16.msra.mxu0 %v669
        %732 = vmatprep.subr.bf16.mxu0 0
        %733 = vmatpush1.bf16.msra.mxu0 %v668
        %734 = vmatprep.subr.bf16.mxu0 0
        %735 = vmatpush1.bf16.msra.mxu0 %v667
        %736 = vmatprep.subr.bf16.mxu0 0
        %737 = vmatpush1.bf16.msra.mxu0 %v666
        %738 = vmatprep.subr.bf16.mxu0 0
        %739 = vmatpush2.bf16.msra.mxu0 0
        %740 = vmatprep.subr.bf16.mxu0 0
        %741 = vmatpush2.bf16.msra.mxu0 0
        %742 = vmatprep.subr.bf16.mxu0 0
        %743 = vmatpush2.bf16.msra.mxu0 0
        %744 = vmatprep.subr.bf16.mxu0 0
        %745 = vmatpush2.bf16.msra.mxu0 0
        %746 = vmatprep.subr.bf16.mxu0 0
        %747 = vmatpush2.bf16.msra.mxu0 0
        %748 = vmatprep.subr.bf16.mxu0 0
        %749 = vmatpush2.bf16.msra.mxu0 0
        %750 = vmatprep.subr.bf16.mxu0 0
        %751 = vmatpush2.bf16.msra.mxu0 0
        %752 = vmatprep.subr.bf16.mxu0 0
        %753 = vmatpush2.bf16.msra.mxu0 0
        %754 = vmatprep.mubr.bf16.mxu0 0
        %755 = vmatmul.mubr.bf16.gmra.mxu0 %v706
        %v756 = vpop.f32.mrf.mxu0
        %v757 = vadd.f32 %v650, %v756
        %v758 = vpop.f32.mrf.mxu0
        %v759 = vpop.f32.mrf.mxu0
        %v760 = vadd.f32 %v651, %v759
        %v761 = vpop.f32.mrf.mxu0
        %762 = vmatprep.mubr.bf16.mxu0 0
        %763 = vmatmul.mubr.bf16.gmra.mxu0 %v707
        %v764 = vpop.f32.mrf.mxu0
        %v765 = vadd.f32 %v652, %v764
        %v766 = vpop.f32.mrf.mxu0
        %v767 = vpop.f32.mrf.mxu0
        %v768 = vadd.f32 %v653, %v767
        %v769 = vpop.f32.mrf.mxu0
        %770 = vmatprep.mubr.bf16.mxu0 0
        %771 = vmatmul.mubr.bf16.gmra.mxu0 %v708
        %v772 = vpop.f32.mrf.mxu0
        %v773 = vadd.f32 %v654, %v772
        %v774 = vpop.f32.mrf.mxu0
        %v775 = vpop.f32.mrf.mxu0
        %v776 = vadd.f32 %v655, %v775
        %v777 = vpop.f32.mrf.mxu0
        %778 = vmatprep.mubr.bf16.mxu0 0
        %779 = vmatmul.mubr.bf16.gmra.mxu0 %v709
        %v780 = vpop.f32.mrf.mxu0
        %v781 = vadd.f32 %v656, %v780
        %v782 = vpop.f32.mrf.mxu0
        %v783 = vpop.f32.mrf.mxu0
        %v784 = vadd.f32 %v657, %v783
        %v785 = vpop.f32.mrf.mxu0
        %786 = vmatprep.mubr.bf16.mxu0 0
        %787 = vmatmul.mubr.bf16.gmra.mxu0 %v710
        %v788 = vpop.f32.mrf.mxu0
        %v789 = vadd.f32 %v658, %v788
        %v790 = vpop.f32.mrf.mxu0
        %v791 = vpop.f32.mrf.mxu0
        %v792 = vadd.f32 %v659, %v791
        %v793 = vpop.f32.mrf.mxu0
        %794 = vmatprep.mubr.bf16.mxu0 0
        %795 = vmatmul.mubr.bf16.gmra.mxu0 %v711
        %v796 = vpop.f32.mrf.mxu0
        %v797 = vadd.f32 %v660, %v796
        %v798 = vpop.f32.mrf.mxu0
        %v799 = vpop.f32.mrf.mxu0
        %v800 = vadd.f32 %v661, %v799
        %v801 = vpop.f32.mrf.mxu0
        %802 = vmatprep.mubr.bf16.mxu0 0
        %803 = vmatmul.mubr.bf16.gmra.mxu0 %v712
        %v804 = vpop.f32.mrf.mxu0
        %v805 = vadd.f32 %v662, %v804
        %v806 = vpop.f32.mrf.mxu0
        %v807 = vpop.f32.mrf.mxu0
        %v808 = vadd.f32 %v663, %v807
        %v809 = vpop.f32.mrf.mxu0
        %810 = vmatprep.mubr.bf16.mxu0 0
        %811 = vmatmul.mubr.bf16.gmra.mxu0 %v713
        %v812 = vpop.f32.mrf.mxu0
        %v813 = vadd.f32 %v664, %v812
        %v814 = vpop.f32.mrf.mxu0
        %v815 = vpop.f32.mrf.mxu0
        %v816 = vadd.f32 %v665, %v815
        %v817 = vpop.f32.mrf.mxu0
        %818 = vdwg.mxu0
        %v819 = vld [vmem:[%s4] sm:$0x1]
        %v821 = vlaneseq
        %v822 = vshrl.u32 %v821, 7
        %v823 = vsub.s32 0, %v822
        %v824 = vrot.slane %v819, %v823
        %v826 = vadd.f32 %v757, %v824
        %v827 = vadd.f32 %v760, %v824
        %v828 = vadd.f32 %v765, %v824
        %v829 = vadd.f32 %v768, %v824
        %v830 = vadd.f32 %v773, %v824
        %v831 = vadd.f32 %v776, %v824
        %v832 = vadd.f32 %v781, %v824
        %v833 = vadd.f32 %v784, %v824
        %v834 = vadd.f32 %v789, %v824
        %v835 = vadd.f32 %v792, %v824
        %v836 = vadd.f32 %v797, %v824
        %v837 = vadd.f32 %v800, %v824
        %v838 = vadd.f32 %v805, %v824
        %v839 = vadd.f32 %v808, %v824
        %v840 = vadd.f32 %v813, %v824
        %v841 = vadd.f32 %v816, %v824
        %v842 = vmax.f32 %v826, 0.0
        %v843 = vmax.f32 %v827, 0.0
        %v844 = vmax.f32 %v828, 0.0
        %v845 = vmax.f32 %v829, 0.0
        %v846 = vmax.f32 %v830, 0.0
        %v847 = vmax.f32 %v831, 0.0
        %v848 = vmax.f32 %v832, 0.0
        %v849 = vmax.f32 %v833, 0.0
        %v850 = vmax.f32 %v834, 0.0
        %v851 = vmax.f32 %v835, 0.0
        %v852 = vmax.f32 %v836, 0.0
        %v853 = vmax.f32 %v837, 0.0
        %v854 = vmax.f32 %v838, 0.0
        %v855 = vmax.f32 %v839, 0.0
        %v856 = vmax.f32 %v840, 0.0
        %v857 = vmax.f32 %v841, 0.0
        %v858 = vpack.c.bf16 %v843, %v842
        %v859 = vpack.c.bf16 %v845, %v844
        %v860 = vpack.c.bf16 %v847, %v846
        %v861 = vpack.c.bf16 %v849, %v848
        %v862 = vpack.c.bf16 %v851, %v850
        %v863 = vpack.c.bf16 %v853, %v852
        %v864 = vpack.c.bf16 %v855, %v854
        %v865 = vpack.c.bf16 %v857, %v856
        %866 = vmatprep.subr.bf16.mxu0 0
        %867 = vmatpush1.bf16.msra.mxu0 %v865
        %868 = vmatprep.subr.bf16.mxu0 0
        %869 = vmatpush1.bf16.msra.mxu0 %v864
        %870 = vmatprep.subr.bf16.mxu0 0
        %871 = vmatpush1.bf16.msra.mxu0 %v863
        %872 = vmatprep.subr.bf16.mxu0 0
        %873 = vmatpush1.bf16.msra.mxu0 %v862
        %874 = vmatprep.subr.bf16.mxu0 0
        %875 = vmatpush1.bf16.msra.mxu0 %v861
        %876 = vmatprep.subr.bf16.mxu0 0
        %877 = vmatpush1.bf16.msra.mxu0 %v860
        %878 = vmatprep.subr.bf16.mxu0 0
        %879 = vmatpush1.bf16.msra.mxu0 %v859
        %880 = vmatprep.subr.bf16.mxu0 0
        %881 = vmatpush1.bf16.msra.mxu0 %v858
        %882 = vmatprep.subr.bf16.mxu0 0
        %883 = vmatpush2.bf16.msra.mxu0 0
        %884 = vmatprep.subr.bf16.mxu0 0
        %885 = vmatpush2.bf16.msra.mxu0 0
        %886 = vmatprep.subr.bf16.mxu0 0
        %887 = vmatpush2.bf16.msra.mxu0 0
        %888 = vmatprep.subr.bf16.mxu0 0
        %889 = vmatpush2.bf16.msra.mxu0 0
        %890 = vmatprep.subr.bf16.mxu0 0
        %891 = vmatpush2.bf16.msra.mxu0 0
        %892 = vmatprep.subr.bf16.mxu0 0
        %893 = vmatpush2.bf16.msra.mxu0 0
        %894 = vmatprep.subr.bf16.mxu0 0
        %895 = vmatpush2.bf16.msra.mxu0 0
        %896 = vmatprep.subr.bf16.mxu0 0
        %897 = vmatpush2.bf16.msra.mxu0 0
        %898 = vmatprep.mubr.bf16.mxu0 0
        %899 = vmatmul.mubr.bf16.gmra.mxu0 %v706
        %v900 = vpop.f32.mrf.mxu0
        %v901 = vadd.f32 0.0, %v900
        %v902 = vpop.f32.mrf.mxu0
        %v903 = vpop.f32.mrf.mxu0
        %v904 = vadd.f32 0.0, %v903
        %v905 = vpop.f32.mrf.mxu0
        %906 = vmatprep.mubr.bf16.mxu0 0
        %907 = vmatmul.mubr.bf16.gmra.mxu0 %v707
        %v908 = vpop.f32.mrf.mxu0
        %v909 = vadd.f32 0.0, %v908
        %v910 = vpop.f32.mrf.mxu0
        %v911 = vpop.f32.mrf.mxu0
        %v912 = vadd.f32 0.0, %v911
        %v913 = vpop.f32.mrf.mxu0
        %914 = vmatprep.mubr.bf16.mxu0 0
        %915 = vmatmul.mubr.bf16.gmra.mxu0 %v708
        %v916 = vpop.f32.mrf.mxu0
        %v917 = vadd.f32 0.0, %v916
        %v918 = vpop.f32.mrf.mxu0
        %v919 = vpop.f32.mrf.mxu0
        %v920 = vadd.f32 0.0, %v919
        %v921 = vpop.f32.mrf.mxu0
        %922 = vmatprep.mubr.bf16.mxu0 0
        %923 = vmatmul.mubr.bf16.gmra.mxu0 %v709
        %v924 = vpop.f32.mrf.mxu0
        %v925 = vadd.f32 0.0, %v924
        %v926 = vpop.f32.mrf.mxu0
        %v927 = vpop.f32.mrf.mxu0
        %v928 = vadd.f32 0.0, %v927
        %v929 = vpop.f32.mrf.mxu0
        %930 = vmatprep.mubr.bf16.mxu0 0
        %931 = vmatmul.mubr.bf16.gmra.mxu0 %v710
        %v932 = vpop.f32.mrf.mxu0
        %v933 = vadd.f32 0.0, %v932
        %v934 = vpop.f32.mrf.mxu0
        %v935 = vpop.f32.mrf.mxu0
        %v936 = vadd.f32 0.0, %v935
        %v937 = vpop.f32.mrf.mxu0
        %938 = vmatprep.mubr.bf16.mxu0 0
        %939 = vmatmul.mubr.bf16.gmra.mxu0 %v711
        %v940 = vpop.f32.mrf.mxu0
        %v941 = vadd.f32 0.0, %v940
        %v942 = vpop.f32.mrf.mxu0
        %v943 = vpop.f32.mrf.mxu0
        %v944 = vadd.f32 0.0, %v943
        %v945 = vpop.f32.mrf.mxu0
        %946 = vmatprep.mubr.bf16.mxu0 0
        %947 = vmatmul.mubr.bf16.gmra.mxu0 %v712
        %v948 = vpop.f32.mrf.mxu0
        %v949 = vadd.f32 0.0, %v948
        %v950 = vpop.f32.mrf.mxu0
        %v951 = vpop.f32.mrf.mxu0
        %v952 = vadd.f32 0.0, %v951
        %v953 = vpop.f32.mrf.mxu0
        %954 = vmatprep.mubr.bf16.mxu0 0
        %955 = vmatmul.mubr.bf16.gmra.mxu0 %v713
        %v956 = vpop.f32.mrf.mxu0
        %v957 = vadd.f32 0.0, %v956
        %v958 = vpop.f32.mrf.mxu0
        %v959 = vpop.f32.mrf.mxu0
        %v960 = vadd.f32 0.0, %v959
        %v961 = vpop.f32.mrf.mxu0
        %962 = vdwg.mxu0
        %v963 = vpack.c.bf16 %v904, %v901
        %v964 = vpack.c.bf16 %v912, %v909
        %v965 = vpack.c.bf16 %v920, %v917
        %v966 = vpack.c.bf16 %v928, %v925
        %v967 = vpack.c.bf16 %v936, %v933
        %v968 = vpack.c.bf16 %v944, %v941
        %v969 = vpack.c.bf16 %v952, %v949
        %v970 = vpack.c.bf16 %v960, %v957
        %v971 = vld [vmem:[%s5] sm:$0xf]
        %v972 = vld [vmem:[%s5 + $0x4] sm:$0xf]
        %v973 = vld [vmem:[%s5 + $0x8] sm:$0xf]
        %v974 = vld [vmem:[%s5 + $0xc] sm:$0xf]
        %v975 = vld [vmem:[%s5 + $0x10] sm:$0xf]
        %v976 = vld [vmem:[%s5 + $0x14] sm:$0xf]
        %v977 = vld [vmem:[%s5 + $0x18] sm:$0xf]
        %v978 = vld [vmem:[%s5 + $0x1c] sm:$0xf]
        %v979 = vld [vmem:[%s5 + $0x20] sm:$0xf]
        %v980 = vld [vmem:[%s5 + $0x24] sm:$0xf]
        %v981 = vld [vmem:[%s5 + $0x28] sm:$0xf]
        %v982 = vld [vmem:[%s5 + $0x2c] sm:$0xf]
        %v983 = vld [vmem:[%s5 + $0x30] sm:$0xf]
        %v984 = vld [vmem:[%s5 + $0x34] sm:$0xf]
        %v985 = vld [vmem:[%s5 + $0x38] sm:$0xf]
        %v986 = vld [vmem:[%s5 + $0x3c] sm:$0xf]
        %v987 = vld [vmem:[%s5 + $0x40] sm:$0xf]
        %v988 = vld [vmem:[%s5 + $0x44] sm:$0xf]
        %v989 = vld [vmem:[%s5 + $0x48] sm:$0xf]
        %v990 = vld [vmem:[%s5 + $0x4c] sm:$0xf]
        %v991 = vld [vmem:[%s5 + $0x50] sm:$0xf]
        %v992 = vld [vmem:[%s5 + $0x54] sm:$0xf]
        %v993 = vld [vmem:[%s5 + $0x58] sm:$0xf]
        %v994 = vld [vmem:[%s5 + $0x5c] sm:$0xf]
        %v995 = vld [vmem:[%s5 + $0x60] sm:$0xf]
        %v996 = vld [vmem:[%s5 + $0x64] sm:$0xf]
        %v997 = vld [vmem:[%s5 + $0x68] sm:$0xf]
        %v998 = vld [vmem:[%s5 + $0x6c] sm:$0xf]
        %v999 = vld [vmem:[%s5 + $0x70] sm:$0xf]
        %v1000 = vld [vmem:[%s5 + $0x74] sm:$0xf]
        %v1001 = vld [vmem:[%s5 + $0x78] sm:$0xf]
        %v1002 = vld [vmem:[%s5 + $0x7c] sm:$0xf]
        %v1003 = vld [vmem:[%s6] sm:$0x1]
        %v1005 = vlaneseq
        %v1006 = vshrl.u32 %v1005, 7
        %v1007 = vsub.s32 0, %v1006
        %v1008 = vrot.slane %v1003, %v1007
        %v1042 = vunpack.c.l.b16 %v971
        %v1043 = vunpack.c.l.b16 %v972
        %v1044 = vunpack.c.l.b16 %v973
        %v1045 = vunpack.c.l.b16 %v974
        %v1046 = vunpack.c.l.b16 %v975
        %v1047 = vunpack.c.l.b16 %v976
        %v1048 = vunpack.c.l.b16 %v977
        %v1049 = vunpack.c.l.b16 %v978
        %v1050 = vunpack.c.l.b16 %v979
        %v1051 = vunpack.c.l.b16 %v980
        %v1052 = vunpack.c.l.b16 %v981
        %v1053 = vunpack.c.l.b16 %v982
        %v1054 = vunpack.c.l.b16 %v983
        %v1055 = vunpack.c.l.b16 %v984
        %v1056 = vunpack.c.l.b16 %v985
        %v1057 = vunpack.c.l.b16 %v986
        %v1058 = vunpack.c.l.b16 %v987
        %v1059 = vunpack.c.l.b16 %v988
        %v1060 = vunpack.c.l.b16 %v989
        %v1061 = vunpack.c.l.b16 %v990
        %v1062 = vunpack.c.l.b16 %v991
        %v1063 = vunpack.c.l.b16 %v992
        %v1064 = vunpack.c.l.b16 %v993
        %v1065 = vunpack.c.l.b16 %v994
        %v1066 = vunpack.c.l.b16 %v995
        %v1067 = vunpack.c.l.b16 %v996
        %v1068 = vunpack.c.l.b16 %v997
        %v1069 = vunpack.c.l.b16 %v998
        %v1070 = vunpack.c.l.b16 %v999
        %v1071 = vunpack.c.l.b16 %v1000
        %v1072 = vunpack.c.l.b16 %v1001
        %v1073 = vunpack.c.l.b16 %v1002
        %v1074 = vpack.c.b16 %v1043, %v1042
        %v1075 = vpack.c.b16 %v1045, %v1044
        %v1076 = vpack.c.b16 %v1047, %v1046
        %v1077 = vpack.c.b16 %v1049, %v1048
        %v1078 = vpack.c.b16 %v1051, %v1050
        %v1079 = vpack.c.b16 %v1053, %v1052
        %v1080 = vpack.c.b16 %v1055, %v1054
        %v1081 = vpack.c.b16 %v1057, %v1056
        %v1082 = vpack.c.b16 %v1059, %v1058
        %v1083 = vpack.c.b16 %v1061, %v1060
        %v1084 = vpack.c.b16 %v1063, %v1062
        %v1085 = vpack.c.b16 %v1065, %v1064
        %v1086 = vpack.c.b16 %v1067, %v1066
        %v1087 = vpack.c.b16 %v1069, %v1068
        %v1088 = vpack.c.b16 %v1071, %v1070
        %v1089 = vpack.c.b16 %v1073, %v1072
        %1106 = vmatprep.subr.bf16.mxu0 0
        %1107 = vmatpush1.bf16.msra.mxu0 %v1081
        %1108 = vmatprep.subr.bf16.mxu0 0
        %1109 = vmatpush1.bf16.msra.mxu0 %v1080
        %1110 = vmatprep.subr.bf16.mxu0 0
        %1111 = vmatpush1.bf16.msra.mxu0 %v1079
        %1112 = vmatprep.subr.bf16.mxu0 0
        %1113 = vmatpush1.bf16.msra.mxu0 %v1078
        %1114 = vmatprep.subr.bf16.mxu0 0
        %1115 = vmatpush1.bf16.msra.mxu0 %v1077
        %1116 = vmatprep.subr.bf16.mxu0 0
        %1117 = vmatpush1.bf16.msra.mxu0 %v1076
        %1118 = vmatprep.subr.bf16.mxu0 0
        %1119 = vmatpush1.bf16.msra.mxu0 %v1075
        %1120 = vmatprep.subr.bf16.mxu0 0
        %1121 = vmatpush1.bf16.msra.mxu0 %v1074
        %1122 = vmatprep.subr.bf16.mxu0 0
        %1123 = vmatpush2.bf16.msra.mxu0 %v1089
        %1124 = vmatprep.subr.bf16.mxu0 0
        %1125 = vmatpush2.bf16.msra.mxu0 %v1088
        %1126 = vmatprep.subr.bf16.mxu0 0
        %1127 = vmatpush2.bf16.msra.mxu0 %v1087
        %1128 = vmatprep.subr.bf16.mxu0 0
        %1129 = vmatpush2.bf16.msra.mxu0 %v1086
        %1130 = vmatprep.subr.bf16.mxu0 0
        %1131 = vmatpush2.bf16.msra.mxu0 %v1085
        %1132 = vmatprep.subr.bf16.mxu0 0
        %1133 = vmatpush2.bf16.msra.mxu0 %v1084
        %1134 = vmatprep.subr.bf16.mxu0 0
        %1135 = vmatpush2.bf16.msra.mxu0 %v1083
        %1136 = vmatprep.subr.bf16.mxu0 0
        %1137 = vmatpush2.bf16.msra.mxu0 %v1082
        %1138 = vmatprep.mubr.bf16.mxu0 %v858
        %1139 = vmatmul.mubr.bf16.gmra.mxu0 %v963
        %v1140 = vpop.f32.mrf.mxu0
        %v1141 = vadd.f32 %v1008, %v1140
        %v1142 = vpop.f32.mrf.mxu0
        %v1143 = vpop.f32.mrf.mxu0
        %v1144 = vadd.f32 %v1008, %v1143
        %v1145 = vpop.f32.mrf.mxu0
        %1146 = vmatprep.mubr.bf16.mxu0 %v859
        %1147 = vmatmul.mubr.bf16.gmra.mxu0 %v964
        %v1148 = vpop.f32.mrf.mxu0
        %v1149 = vadd.f32 %v1008, %v1148
        %v1150 = vpop.f32.mrf.mxu0
        %v1151 = vpop.f32.mrf.mxu0
        %v1152 = vadd.f32 %v1008, %v1151
        %v1153 = vpop.f32.mrf.mxu0
        %1154 = vmatprep.mubr.bf16.mxu0 %v860
        %1155 = vmatmul.mubr.bf16.gmra.mxu0 %v965
        %v1156 = vpop.f32.mrf.mxu0
        %v1157 = vadd.f32 %v1008, %v1156
        %v1158 = vpop.f32.mrf.mxu0
        %v1159 = vpop.f32.mrf.mxu0
        %v1160 = vadd.f32 %v1008, %v1159
        %v1161 = vpop.f32.mrf.mxu0
        %1162 = vmatprep.mubr.bf16.mxu0 %v861
        %1163 = vmatmul.mubr.bf16.gmra.mxu0 %v966
        %v1164 = vpop.f32.mrf.mxu0
        %v1165 = vadd.f32 %v1008, %v1164
        %v1166 = vpop.f32.mrf.mxu0
        %v1167 = vpop.f32.mrf.mxu0
        %v1168 = vadd.f32 %v1008, %v1167
        %v1169 = vpop.f32.mrf.mxu0
        %1170 = vmatprep.mubr.bf16.mxu0 %v862
        %1171 = vmatmul.mubr.bf16.gmra.mxu0 %v967
        %v1172 = vpop.f32.mrf.mxu0
        %v1173 = vadd.f32 %v1008, %v1172
        %v1174 = vpop.f32.mrf.mxu0
        %v1175 = vpop.f32.mrf.mxu0
        %v1176 = vadd.f32 %v1008, %v1175
        %v1177 = vpop.f32.mrf.mxu0
        %1178 = vmatprep.mubr.bf16.mxu0 %v863
        %1179 = vmatmul.mubr.bf16.gmra.mxu0 %v968
        %v1180 = vpop.f32.mrf.mxu0
        %v1181 = vadd.f32 %v1008, %v1180
        %v1182 = vpop.f32.mrf.mxu0
        %v1183 = vpop.f32.mrf.mxu0
        %v1184 = vadd.f32 %v1008, %v1183
        %v1185 = vpop.f32.mrf.mxu0
        %1186 = vmatprep.mubr.bf16.mxu0 %v864
        %1187 = vmatmul.mubr.bf16.gmra.mxu0 %v969
        %v1188 = vpop.f32.mrf.mxu0
        %v1189 = vadd.f32 %v1008, %v1188
        %v1190 = vpop.f32.mrf.mxu0
        %v1191 = vpop.f32.mrf.mxu0
        %v1192 = vadd.f32 %v1008, %v1191
        %v1193 = vpop.f32.mrf.mxu0
        %1194 = vmatprep.mubr.bf16.mxu0 %v865
        %1195 = vmatmul.mubr.bf16.gmra.mxu0 %v970
        %v1196 = vpop.f32.mrf.mxu0
        %v1197 = vadd.f32 %v1008, %v1196
        %v1198 = vpop.f32.mrf.mxu0
        %v1199 = vpop.f32.mrf.mxu0
        %v1200 = vadd.f32 %v1008, %v1199
        %v1201 = vpop.f32.mrf.mxu0
        %1202 = vdwg.mxu0
        %v1203 = vmax.f32 %v1141, 0.0
        %v1204 = vmax.f32 %v1144, 0.0
        %v1205 = vmax.f32 %v1149, 0.0
        %v1206 = vmax.f32 %v1152, 0.0
        %v1207 = vmax.f32 %v1157, 0.0
        %v1208 = vmax.f32 %v1160, 0.0
        %v1209 = vmax.f32 %v1165, 0.0
        %v1210 = vmax.f32 %v1168, 0.0
        %v1211 = vmax.f32 %v1173, 0.0
        %v1212 = vmax.f32 %v1176, 0.0
        %v1213 = vmax.f32 %v1181, 0.0
        %v1214 = vmax.f32 %v1184, 0.0
        %v1215 = vmax.f32 %v1189, 0.0
        %v1216 = vmax.f32 %v1192, 0.0
        %v1217 = vmax.f32 %v1197, 0.0
        %v1218 = vmax.f32 %v1200, 0.0
        %v1219 = vpack.c.bf16 %v1204, %v1203
        %v1220 = vpack.c.bf16 %v1206, %v1205
        %v1221 = vpack.c.bf16 %v1208, %v1207
        %v1222 = vpack.c.bf16 %v1210, %v1209
        %v1223 = vpack.c.bf16 %v1212, %v1211
        %v1224 = vpack.c.bf16 %v1214, %v1213
        %v1225 = vpack.c.bf16 %v1216, %v1215
        %v1226 = vpack.c.bf16 %v1218, %v1217
        %1227 = vmatprep.subr.bf16.mxu0 0
        %1228 = vmatpush1.bf16.msra.mxu0 %v1226
        %1229 = vmatprep.subr.bf16.mxu0 0
        %1230 = vmatpush1.bf16.msra.mxu0 %v1225
        %1231 = vmatprep.subr.bf16.mxu0 0
        %1232 = vmatpush1.bf16.msra.mxu0 %v1224
        %1233 = vmatprep.subr.bf16.mxu0 0
        %1234 = vmatpush1.bf16.msra.mxu0 %v1223
        %1235 = vmatprep.subr.bf16.mxu0 0
        %1236 = vmatpush1.bf16.msra.mxu0 %v1222
        %1237 = vmatprep.subr.bf16.mxu0 0
        %1238 = vmatpush1.bf16.msra.mxu0 %v1221
        %1239 = vmatprep.subr.bf16.mxu0 0
        %1240 = vmatpush1.bf16.msra.mxu0 %v1220
        %1241 = vmatprep.subr.bf16.mxu0 0
        %1242 = vmatpush1.bf16.msra.mxu0 %v1219
        %1243 = vmatprep.subr.bf16.mxu0 0
        %1244 = vmatpush2.bf16.msra.mxu0 0
        %1245 = vmatprep.subr.bf16.mxu0 0
        %1246 = vmatpush2.bf16.msra.mxu0 0
        %1247 = vmatprep.subr.bf16.mxu0 0
        %1248 = vmatpush2.bf16.msra.mxu0 0
        %1249 = vmatprep.subr.bf16.mxu0 0
        %1250 = vmatpush2.bf16.msra.mxu0 0
        %1251 = vmatprep.subr.bf16.mxu0 0
        %1252 = vmatpush2.bf16.msra.mxu0 0
        %1253 = vmatprep.subr.bf16.mxu0 0
        %1254 = vmatpush2.bf16.msra.mxu0 0
        %1255 = vmatprep.subr.bf16.mxu0 0
        %1256 = vmatpush2.bf16.msra.mxu0 0
        %1257 = vmatprep.subr.bf16.mxu0 0
        %1258 = vmatpush2.bf16.msra.mxu0 0
        %1259 = vmatprep.mubr.bf16.mxu0 0
        %1260 = vmatmul.mubr.bf16.gmra.mxu0 %v706
        %v1261 = vpop.f32.mrf.mxu0
        %v1262 = vadd.f32 0.0, %v1261
        %v1263 = vpop.f32.mrf.mxu0
        %v1264 = vpop.f32.mrf.mxu0
        %v1265 = vadd.f32 0.0, %v1264
        %v1266 = vpop.f32.mrf.mxu0
        %1267 = vmatprep.mubr.bf16.mxu0 0
        %1268 = vmatmul.mubr.bf16.gmra.mxu0 %v707
        %v1269 = vpop.f32.mrf.mxu0
        %v1270 = vadd.f32 0.0, %v1269
        %v1271 = vpop.f32.mrf.mxu0
        %v1272 = vpop.f32.mrf.mxu0
        %v1273 = vadd.f32 0.0, %v1272
        %v1274 = vpop.f32.mrf.mxu0
        %1275 = vmatprep.mubr.bf16.mxu0 0
        %1276 = vmatmul.mubr.bf16.gmra.mxu0 %v708
        %v1277 = vpop.f32.mrf.mxu0
        %v1278 = vadd.f32 0.0, %v1277
        %v1279 = vpop.f32.mrf.mxu0
        %v1280 = vpop.f32.mrf.mxu0
        %v1281 = vadd.f32 0.0, %v1280
        %v1282 = vpop.f32.mrf.mxu0
        %1283 = vmatprep.mubr.bf16.mxu0 0
        %1284 = vmatmul.mubr.bf16.gmra.mxu0 %v709
        %v1285 = vpop.f32.mrf.mxu0
        %v1286 = vadd.f32 0.0, %v1285
        %v1287 = vpop.f32.mrf.mxu0
        %v1288 = vpop.f32.mrf.mxu0
        %v1289 = vadd.f32 0.0, %v1288
        %v1290 = vpop.f32.mrf.mxu0
        %1291 = vmatprep.mubr.bf16.mxu0 0
        %1292 = vmatmul.mubr.bf16.gmra.mxu0 %v710
        %v1293 = vpop.f32.mrf.mxu0
        %v1294 = vadd.f32 0.0, %v1293
        %v1295 = vpop.f32.mrf.mxu0
        %v1296 = vpop.f32.mrf.mxu0
        %v1297 = vadd.f32 0.0, %v1296
        %v1298 = vpop.f32.mrf.mxu0
        %1299 = vmatprep.mubr.bf16.mxu0 0
        %1300 = vmatmul.mubr.bf16.gmra.mxu0 %v711
        %v1301 = vpop.f32.mrf.mxu0
        %v1302 = vadd.f32 0.0, %v1301
        %v1303 = vpop.f32.mrf.mxu0
        %v1304 = vpop.f32.mrf.mxu0
        %v1305 = vadd.f32 0.0, %v1304
        %v1306 = vpop.f32.mrf.mxu0
        %1307 = vmatprep.mubr.bf16.mxu0 0
        %1308 = vmatmul.mubr.bf16.gmra.mxu0 %v712
        %v1309 = vpop.f32.mrf.mxu0
        %v1310 = vadd.f32 0.0, %v1309
        %v1311 = vpop.f32.mrf.mxu0
        %v1312 = vpop.f32.mrf.mxu0
        %v1313 = vadd.f32 0.0, %v1312
        %v1314 = vpop.f32.mrf.mxu0
        %1315 = vmatprep.mubr.bf16.mxu0 0
        %1316 = vmatmul.mubr.bf16.gmra.mxu0 %v713
        %v1317 = vpop.f32.mrf.mxu0
        %v1318 = vadd.f32 0.0, %v1317
        %v1319 = vpop.f32.mrf.mxu0
        %v1320 = vpop.f32.mrf.mxu0
        %v1321 = vadd.f32 0.0, %v1320
        %v1322 = vpop.f32.mrf.mxu0
        %1323 = vdwg.mxu0
        %v1324 = vpack.c.bf16 %v1265, %v1262
        %v1325 = vpack.c.bf16 %v1273, %v1270
        %v1326 = vpack.c.bf16 %v1281, %v1278
        %v1327 = vpack.c.bf16 %v1289, %v1286
        %v1328 = vpack.c.bf16 %v1297, %v1294
        %v1329 = vpack.c.bf16 %v1305, %v1302
        %v1330 = vpack.c.bf16 %v1313, %v1310
        %v1331 = vpack.c.bf16 %v1321, %v1318
        %v1332 = vld [vmem:[%s7] sm:$0xf]
        %v1333 = vld [vmem:[%s7 + $0x4] sm:$0xf]
        %v1334 = vld [vmem:[%s7 + $0x8] sm:$0xf]
        %v1335 = vld [vmem:[%s7 + $0xc] sm:$0xf]
        %v1336 = vld [vmem:[%s7 + $0x10] sm:$0xf]
        %v1337 = vld [vmem:[%s7 + $0x14] sm:$0xf]
        %v1338 = vld [vmem:[%s7 + $0x18] sm:$0xf]
        %v1339 = vld [vmem:[%s7 + $0x1c] sm:$0xf]
        %v1340 = vld [vmem:[%s7 + $0x20] sm:$0xf]
        %v1341 = vld [vmem:[%s7 + $0x24] sm:$0xf]
        %v1342 = vld [vmem:[%s7 + $0x28] sm:$0xf]
        %v1343 = vld [vmem:[%s7 + $0x2c] sm:$0xf]
        %v1344 = vld [vmem:[%s7 + $0x30] sm:$0xf]
        %v1345 = vld [vmem:[%s7 + $0x34] sm:$0xf]
        %v1346 = vld [vmem:[%s7 + $0x38] sm:$0xf]
        %v1347 = vld [vmem:[%s7 + $0x3c] sm:$0xf]
        %v1348 = vld [vmem:[%s7 + $0x40] sm:$0xf]
        %v1349 = vld [vmem:[%s7 + $0x44] sm:$0xf]
        %v1350 = vld [vmem:[%s7 + $0x48] sm:$0xf]
        %v1351 = vld [vmem:[%s7 + $0x4c] sm:$0xf]
        %v1352 = vld [vmem:[%s7 + $0x50] sm:$0xf]
        %v1353 = vld [vmem:[%s7 + $0x54] sm:$0xf]
        %v1354 = vld [vmem:[%s7 + $0x58] sm:$0xf]
        %v1355 = vld [vmem:[%s7 + $0x5c] sm:$0xf]
        %v1356 = vld [vmem:[%s7 + $0x60] sm:$0xf]
        %v1357 = vld [vmem:[%s7 + $0x64] sm:$0xf]
        %v1358 = vld [vmem:[%s7 + $0x68] sm:$0xf]
        %v1359 = vld [vmem:[%s7 + $0x6c] sm:$0xf]
        %v1360 = vld [vmem:[%s7 + $0x70] sm:$0xf]
        %v1361 = vld [vmem:[%s7 + $0x74] sm:$0xf]
        %v1362 = vld [vmem:[%s7 + $0x78] sm:$0xf]
        %v1363 = vld [vmem:[%s7 + $0x7c] sm:$0xf]
        %v1364 = vld [vmem:[%s8] sm:$0x1]
        %v1366 = vlaneseq
        %v1367 = vshrl.u32 %v1366, 7
        %v1368 = vsub.s32 0, %v1367
        %v1369 = vrot.slane %v1364, %v1368
        %v1403 = vunpack.c.l.b16 %v1332
        %v1404 = vunpack.c.l.b16 %v1333
        %v1405 = vunpack.c.l.b16 %v1334
        %v1406 = vunpack.c.l.b16 %v1335
        %v1407 = vunpack.c.l.b16 %v1336
        %v1408 = vunpack.c.l.b16 %v1337
        %v1409 = vunpack.c.l.b16 %v1338
        %v1410 = vunpack.c.l.b16 %v1339
        %v1411 = vunpack.c.l.b16 %v1340
        %v1412 = vunpack.c.l.b16 %v1341
        %v1413 = vunpack.c.l.b16 %v1342
        %v1414 = vunpack.c.l.b16 %v1343
        %v1415 = vunpack.c.l.b16 %v1344
        %v1416 = vunpack.c.l.b16 %v1345
        %v1417 = vunpack.c.l.b16 %v1346
        %v1418 = vunpack.c.l.b16 %v1347
        %v1419 = vunpack.c.l.b16 %v1348
        %v1420 = vunpack.c.l.b16 %v1349
        %v1421 = vunpack.c.l.b16 %v1350
        %v1422 = vunpack.c.l.b16 %v1351
        %v1423 = vunpack.c.l.b16 %v1352
        %v1424 = vunpack.c.l.b16 %v1353
        %v1425 = vunpack.c.l.b16 %v1354
        %v1426 = vunpack.c.l.b16 %v1355
        %v1427 = vunpack.c.l.b16 %v1356
        %v1428 = vunpack.c.l.b16 %v1357
        %v1429 = vunpack.c.l.b16 %v1358
        %v1430 = vunpack.c.l.b16 %v1359
        %v1431 = vunpack.c.l.b16 %v1360
        %v1432 = vunpack.c.l.b16 %v1361
        %v1433 = vunpack.c.l.b16 %v1362
        %v1434 = vunpack.c.l.b16 %v1363
        %v1435 = vpack.c.b16 %v1404, %v1403
        %v1436 = vpack.c.b16 %v1406, %v1405
        %v1437 = vpack.c.b16 %v1408, %v1407
        %v1438 = vpack.c.b16 %v1410, %v1409
        %v1439 = vpack.c.b16 %v1412, %v1411
        %v1440 = vpack.c.b16 %v1414, %v1413
        %v1441 = vpack.c.b16 %v1416, %v1415
        %v1442 = vpack.c.b16 %v1418, %v1417
        %v1443 = vpack.c.b16 %v1420, %v1419
        %v1444 = vpack.c.b16 %v1422, %v1421
        %v1445 = vpack.c.b16 %v1424, %v1423
        %v1446 = vpack.c.b16 %v1426, %v1425
        %v1447 = vpack.c.b16 %v1428, %v1427
        %v1448 = vpack.c.b16 %v1430, %v1429
        %v1449 = vpack.c.b16 %v1432, %v1431
        %v1450 = vpack.c.b16 %v1434, %v1433
        %1467 = vmatprep.subr.bf16.mxu0 0
        %1468 = vmatpush1.bf16.msra.mxu0 %v1442
        %1469 = vmatprep.subr.bf16.mxu0 0
        %1470 = vmatpush1.bf16.msra.mxu0 %v1441
        %1471 = vmatprep.subr.bf16.mxu0 0
        %1472 = vmatpush1.bf16.msra.mxu0 %v1440
        %1473 = vmatprep.subr.bf16.mxu0 0
        %1474 = vmatpush1.bf16.msra.mxu0 %v1439
        %1475 = vmatprep.subr.bf16.mxu0 0
        %1476 = vmatpush1.bf16.msra.mxu0 %v1438
        %1477 = vmatprep.subr.bf16.mxu0 0
        %1478 = vmatpush1.bf16.msra.mxu0 %v1437
        %1479 = vmatprep.subr.bf16.mxu0 0
        %1480 = vmatpush1.bf16.msra.mxu0 %v1436
        %1481 = vmatprep.subr.bf16.mxu0 0
        %1482 = vmatpush1.bf16.msra.mxu0 %v1435
        %1483 = vmatprep.subr.bf16.mxu0 0
        %1484 = vmatpush2.bf16.msra.mxu0 %v1450
        %1485 = vmatprep.subr.bf16.mxu0 0
        %1486 = vmatpush2.bf16.msra.mxu0 %v1449
        %1487 = vmatprep.subr.bf16.mxu0 0
        %1488 = vmatpush2.bf16.msra.mxu0 %v1448
        %1489 = vmatprep.subr.bf16.mxu0 0
        %1490 = vmatpush2.bf16.msra.mxu0 %v1447
        %1491 = vmatprep.subr.bf16.mxu0 0
        %1492 = vmatpush2.bf16.msra.mxu0 %v1446
        %1493 = vmatprep.subr.bf16.mxu0 0
        %1494 = vmatpush2.bf16.msra.mxu0 %v1445
        %1495 = vmatprep.subr.bf16.mxu0 0
        %1496 = vmatpush2.bf16.msra.mxu0 %v1444
        %1497 = vmatprep.subr.bf16.mxu0 0
        %1498 = vmatpush2.bf16.msra.mxu0 %v1443
        %1499 = vmatprep.mubr.bf16.mxu0 %v1219
        %1500 = vmatmul.mubr.bf16.gmra.mxu0 %v1324
        %v1501 = vpop.f32.mrf.mxu0
        %v1502 = vadd.f32 %v1369, %v1501
        %v1503 = vpop.f32.mrf.mxu0
        %v1504 = vpop.f32.mrf.mxu0
        %v1505 = vadd.f32 %v1369, %v1504
        %v1506 = vpop.f32.mrf.mxu0
        %1507 = vmatprep.mubr.bf16.mxu0 %v1220
        %1508 = vmatmul.mubr.bf16.gmra.mxu0 %v1325
        %v1509 = vpop.f32.mrf.mxu0
        %v1510 = vadd.f32 %v1369, %v1509
        %v1511 = vpop.f32.mrf.mxu0
        %v1512 = vpop.f32.mrf.mxu0
        %v1513 = vadd.f32 %v1369, %v1512
        %v1514 = vpop.f32.mrf.mxu0
        %1515 = vmatprep.mubr.bf16.mxu0 %v1221
        %1516 = vmatmul.mubr.bf16.gmra.mxu0 %v1326
        %v1517 = vpop.f32.mrf.mxu0
        %v1518 = vadd.f32 %v1369, %v1517
        %v1519 = vpop.f32.mrf.mxu0
        %v1520 = vpop.f32.mrf.mxu0
        %v1521 = vadd.f32 %v1369, %v1520
        %v1522 = vpop.f32.mrf.mxu0
        %1523 = vmatprep.mubr.bf16.mxu0 %v1222
        %1524 = vmatmul.mubr.bf16.gmra.mxu0 %v1327
        %v1525 = vpop.f32.mrf.mxu0
        %v1526 = vadd.f32 %v1369, %v1525
        %v1527 = vpop.f32.mrf.mxu0
        %v1528 = vpop.f32.mrf.mxu0
        %v1529 = vadd.f32 %v1369, %v1528
        %v1530 = vpop.f32.mrf.mxu0
        %1531 = vmatprep.mubr.bf16.mxu0 %v1223
        %1532 = vmatmul.mubr.bf16.gmra.mxu0 %v1328
        %v1533 = vpop.f32.mrf.mxu0
        %v1534 = vadd.f32 %v1369, %v1533
        %v1535 = vpop.f32.mrf.mxu0
        %v1536 = vpop.f32.mrf.mxu0
        %v1537 = vadd.f32 %v1369, %v1536
        %v1538 = vpop.f32.mrf.mxu0
        %1539 = vmatprep.mubr.bf16.mxu0 %v1224
        %1540 = vmatmul.mubr.bf16.gmra.mxu0 %v1329
        %v1541 = vpop.f32.mrf.mxu0
        %v1542 = vadd.f32 %v1369, %v1541
        %v1543 = vpop.f32.mrf.mxu0
        %v1544 = vpop.f32.mrf.mxu0
        %v1545 = vadd.f32 %v1369, %v1544
        %v1546 = vpop.f32.mrf.mxu0
        %1547 = vmatprep.mubr.bf16.mxu0 %v1225
        %1548 = vmatmul.mubr.bf16.gmra.mxu0 %v1330
        %v1549 = vpop.f32.mrf.mxu0
        %v1550 = vadd.f32 %v1369, %v1549
        %v1551 = vpop.f32.mrf.mxu0
        %v1552 = vpop.f32.mrf.mxu0
        %v1553 = vadd.f32 %v1369, %v1552
        %v1554 = vpop.f32.mrf.mxu0
        %1555 = vmatprep.mubr.bf16.mxu0 %v1226
        %1556 = vmatmul.mubr.bf16.gmra.mxu0 %v1331
        %v1557 = vpop.f32.mrf.mxu0
        %v1558 = vadd.f32 %v1369, %v1557
        %v1559 = vpop.f32.mrf.mxu0
        %v1560 = vpop.f32.mrf.mxu0
        %v1561 = vadd.f32 %v1369, %v1560
        %v1562 = vpop.f32.mrf.mxu0
        %1563 = vdwg.mxu0
        %v1564 = vmax.f32 %v1502, 0.0
        %v1565 = vmax.f32 %v1505, 0.0
        %v1566 = vmax.f32 %v1510, 0.0
        %v1567 = vmax.f32 %v1513, 0.0
        %v1568 = vmax.f32 %v1518, 0.0
        %v1569 = vmax.f32 %v1521, 0.0
        %v1570 = vmax.f32 %v1526, 0.0
        %v1571 = vmax.f32 %v1529, 0.0
        %v1572 = vmax.f32 %v1534, 0.0
        %v1573 = vmax.f32 %v1537, 0.0
        %v1574 = vmax.f32 %v1542, 0.0
        %v1575 = vmax.f32 %v1545, 0.0
        %v1576 = vmax.f32 %v1550, 0.0
        %v1577 = vmax.f32 %v1553, 0.0
        %v1578 = vmax.f32 %v1558, 0.0
        %v1579 = vmax.f32 %v1561, 0.0
        %v1580 = vld [vmem:[%s374] sm:$0xff]
        %v1581 = vrot.slane %v1580, 4
        %v1582 = vmax.f32 %v1580, %v1581
        %v1583 = vrot.slane %v1582, 2
        %v1584 = vmax.f32 %v1582, %v1583
        %v1585 = vrot.slane %v1584, 1
        %v1586 = vmax.f32 %v1584, %v1585
        %v1587 = vsub.f32 %v1580, %v1586
        %v1588 = vmul.f32 %v1587, 1.442695
        %v1589 = vpow.pop %v1588
        %v1590 = vrot.slane %v1589, 4
        %v1591 = vadd.f32 %v1589, %v1590
        %v1592 = vrot.slane %v1591, 2
        %v1593 = vadd.f32 %v1591, %v1592
        %v1594 = vrot.slane %v1593, 1
        %v1595 = vadd.f32 %v1593, %v1594
        %v1596 = vrcp.pop %v1595
        %v1597 = vmul.f32 %v1589, %v1596
        %v1598 = vlaneseq
        %v1599 = vand.u32 %v1598, 127
        %vm1600 = vcmp.lt.s32.totalorder %v1599, 68
        %v1601 = vsel %vm1600, %v1597, 0.0
        %1602 = vmatprep.subr.mxu0 0.0
        %1603 = vmatpush1.msra.mxu0 %v1579
        %1604 = vmatprep.subr.mxu0 0.0
        %1605 = vmatpush1.msra.mxu0 %v1578
        %1606 = vmatprep.subr.mxu0 0.0
        %1607 = vmatpush1.msra.mxu0 %v1577
        %1608 = vmatprep.subr.mxu0 0.0
        %1609 = vmatpush1.msra.mxu0 %v1576
        %1610 = vmatprep.subr.mxu0 0.0
        %1611 = vmatpush1.msra.mxu0 %v1575
        %1612 = vmatprep.subr.mxu0 0.0
        %1613 = vmatpush1.msra.mxu0 %v1574
        %1614 = vmatprep.subr.mxu0 0.0
        %1615 = vmatpush1.msra.mxu0 %v1573
        %1616 = vmatprep.subr.mxu0 0.0
        %1617 = vmatpush1.msra.mxu0 %v1572
        %1618 = vmatprep.subr.mxu0 0.0
        %1619 = vmatpush1.msra.mxu0 %v1571
        %1620 = vmatprep.subr.mxu0 0.0
        %1621 = vmatpush1.msra.mxu0 %v1570
        %1622 = vmatprep.subr.mxu0 0.0
        %1623 = vmatpush1.msra.mxu0 %v1569
        %1624 = vmatprep.subr.mxu0 0.0
        %1625 = vmatpush1.msra.mxu0 %v1568
        %1626 = vmatprep.subr.mxu0 0.0
        %1627 = vmatpush1.msra.mxu0 %v1567
        %1628 = vmatprep.subr.mxu0 0.0
        %1629 = vmatpush1.msra.mxu0 %v1566
        %1630 = vmatprep.subr.mxu0 0.0
        %1631 = vmatpush1.msra.mxu0 %v1565
        %1632 = vmatprep.subr.mxu0 0.0
        %1633 = vmatpush1.msra.mxu0 %v1564
        %1634 = vmatprep.subr.mxu0 0.0
        %1635 = vmatpush2.msra.mxu0 0.0
        %1636 = vmatprep.subr.mxu0 0.0
        %1637 = vmatpush2.msra.mxu0 0.0
        %1638 = vmatprep.subr.mxu0 0.0
        %1639 = vmatpush2.msra.mxu0 0.0
        %1640 = vmatprep.subr.mxu0 0.0
        %1641 = vmatpush2.msra.mxu0 0.0
        %1642 = vmatprep.subr.mxu0 0.0
        %1643 = vmatpush2.msra.mxu0 0.0
        %1644 = vmatprep.subr.mxu0 0.0
        %1645 = vmatpush2.msra.mxu0 0.0
        %1646 = vmatprep.subr.mxu0 0.0
        %1647 = vmatpush2.msra.mxu0 0.0
        %1648 = vmatprep.subr.mxu0 0.0
        %1649 = vmatpush2.msra.mxu0 0.0
        %1650 = vmatprep.subr.mxu0 0.0
        %1651 = vmatpush2.msra.mxu0 0.0
        %1652 = vmatprep.subr.mxu0 0.0
        %1653 = vmatpush2.msra.mxu0 0.0
        %1654 = vmatprep.subr.mxu0 0.0
        %1655 = vmatpush2.msra.mxu0 0.0
        %1656 = vmatprep.subr.mxu0 0.0
        %1657 = vmatpush2.msra.mxu0 0.0
        %1658 = vmatprep.subr.mxu0 0.0
        %1659 = vmatpush2.msra.mxu0 0.0
        %1660 = vmatprep.subr.mxu0 0.0
        %1661 = vmatpush2.msra.mxu0 0.0
        %1662 = vmatprep.subr.mxu0 0.0
        %1663 = vmatpush2.msra.mxu0 0.0
        %1664 = vmatprep.subr.mxu0 0.0
        %1665 = vmatpush2.msra.mxu0 0.0
        %1666 = vmatprep.mubr.f32.mxu0 0.0
        %1667 = vmatmul.mubr.f32.gmra.mxu0 %v1601
        %v1668 = vpop.f32.mrf.mxu0
        %v1669 = vadd.f32 0.0, %v1668
        %v1670 = vpop.f32.mrf.mxu0
        %1671 = vdwg.mxu0
        %1672 = vst [vmem:[%s365] sm:$0xff] %v1669
        %s1673 = sand.u32 %s252, 1
        %s1674 = scalar_lea.sflag [#allocation3], %s1673
        %s1675 = sand.u32 %s252, 1
        %s1676 = smul.addr %s1675, 8
        %s1677 = scalar_lea.vmem [#allocation2], %s1676
        // Predicated region
        $region61: #{lmrknet_forward.1} parent=59 // pred_check
          %p1678 = pneg %p262
        $region62: #{lmrknet_forward.1} parent=59 // pred_check_branch
          %1680 = sbr.rel (%p1678) target = $region64
        $region63: #{lmrknet_forward.1} parent=59 // pred_region
          %s1682 = ssub.s32 128, 128
          %1683 = vsyncadd %s1674, %s1682
          %s1684 = smul.addr %s24, 128
          %s1685 = scalar_lea.hbm %s10, %s1684
          %s1687 = sshll.u32 %s1677, 4
          %s1688 = int_to_ptr.vmem [resolvable:$true] %s1687
          %1690 = dma.vmem_to_hbm [thread:$0]  %s1688, 128, %s1685, %s1674
        $region64: #{lmrknet_forward.1} parent=59 // pred_fallthru
          _
      $region60: #{lmrknet_forward.1} parent=5 // pred_fallthru
        _
      %p1691 = scmp.le.s32.totalorder 2, %s19
      // Predicated region
      $region65: #{lmrknet_forward.1} parent=5 // pred_check
        %p1692 = pneg %p1691
      $region66: #{lmrknet_forward.1} parent=5 // pred_check_branch
        %1694 = sbr.rel (%p1692) target = $region68
      $region67: #{lmrknet_forward.1} parent=5 // pred_region
        %s1695 = ssub.s32 %s19, 2
        // Predicated region
        $region69: #{lmrknet_forward.1} parent=67 // pred_check
          %p1696 = pneg %p268
        $region70: #{lmrknet_forward.1} parent=67 // pred_check_branch
          %1698 = sbr.rel (%p1696) target = $region72
        $region71: #{lmrknet_forward.1} parent=67 // pred_region
          %s1699 = sand.u32 %s253, 1
          %s1700 = scalar_lea.sflag [#allocation3], %s1699
          %s1701 = sand.u32 %s253, 1
          %s1702 = smul.addr %s1701, 8
          %s1703 = scalar_lea.vmem [#allocation2], %s1702
          %1704 = dma.done %s1700, 128
        $region72: #{lmrknet_forward.1} parent=67 // pred_fallthru
          _
      $region68: #{lmrknet_forward.1} parent=5 // pred_fallthru
        _
    $region6: #{lmrknet_forward.1} parent=1 // loop_footer
      %s23 = sadd.s32 1, %s19
    $region7: #{lmrknet_forward.1} parent=1 // loop_footer_branch
      %18 = sbr.rel target = $region3
    $region8: #{lmrknet_forward.1} parent=1 // loop_exit
      _
    %1705 = vsyncpa [#allocation3], 1
    %s1706 = scalar_lea.sflag [#allocation3], 1
    %1707 = vsyncpa %s1706, 1

</llo_original>
